<compile_context>
chip_gen: v7x
topology: tpu7x:2x2x1
jax: 0.10.0
libtpu: 0.0.40
codegen_flags: <defaults>
</compile_context>

<pallas_src>
import math

import jax
import jax.numpy as jnp
from jax import lax
from jax.experimental import pallas as pl
from jax.experimental.pallas import tpu as pltpu


# ---------------------------------------------------------------------------
# PyTorch-exact bilinear (align_corners=False) 1-D interpolation matrix.
# ---------------------------------------------------------------------------
def _bilinear_matrix_1d(out_size, in_size):
    if in_size == out_size:
        return jnp.eye(out_size, dtype=jnp.float32)
    scale = in_size / out_size
    dst = jnp.arange(out_size, dtype=jnp.float32)
    src = jnp.maximum((dst + 0.5) * scale - 0.5, 0.0)      # PyTorch clamps negatives
    i0 = jnp.minimum(jnp.floor(src).astype(jnp.int32), in_size - 1)
    i1 = jnp.minimum(i0 + 1, in_size - 1)
    frac = src - i0.astype(jnp.float32)
    rows = jnp.arange(out_size)
    m = jnp.zeros((out_size, in_size), jnp.float32)
    m = m.at[rows, i0].add(1.0 - frac)
    m = m.at[rows, i1].add(frac)
    return m


def _bilinear_matrix_2d(out_hw, in_hw):
    # Dense (H0*W0, h*w) operator -- used only by the pure-JAX reference.
    return jnp.kron(_bilinear_matrix_1d(out_hw[0], in_hw[0]),
                    _bilinear_matrix_1d(out_hw[1], in_hw[1]))


# ---------------------------------------------------------------------------
# Kernel: one grid step = `rt` output rows of one batch element.
# ---------------------------------------------------------------------------
def _memory_proj_kernel(mem0_ref, pos0_ref,              # (1, rt*W0, C)   level 0
                        mem1_ref, pos1_ref,              # (1, h1, w1*C)   level 1
                        mem2_ref, pos2_ref,              # (1, h2, w2*C)   level 2
                        rh1_ref, rh2_ref,                # (rt, h1), (rt, h2)
                        rwb1_ref, rwb2_ref,              # (rt, W0, w1), (rt, W0, w2)
                        w1_ref, b1_ref,                  # (C, C), (C, 1)
                        w2_ref, b2_ref,                  # (Cout, C), (Cout, 1)
                        o_ref):                          # (1, Cout, rt*W0)
    f32 = jnp.float32
    mm_dtype = w1_ref.dtype
    c_in = w1_ref.shape[1]
    rt, w0, _ = rwb1_ref.shape

    def upsampled_level(mem_ref, pos_ref, rh_ref, rwb_ref):
        # Separable bilinear upsample of one level onto this tile's rows,
        # produced directly in channels-last (rt*W0, C) layout.
        w_in = rwb_ref.shape[2]
        x = (mem_ref[0] + pos_ref[0]).astype(f32)                    # (h, w*C)
        t = jnp.dot(rh_ref[...], x, preferred_element_type=f32)      # (rt, w*C)
        t3 = t.reshape(rt, w_in, c_in)                                # (rt, w, C)
        r = jnp.einsum('rWw,rwc->rWc', rwb_ref[...], t3,
                       preferred_element_type=f32)                    # (rt, W0, C)
        return r.reshape(rt * w0, c_in)

    # Level 0 is already at target resolution: fused (memory + memory_pos).
    summed = (mem0_ref[0] + pos0_ref[0]).astype(f32)                  # (rt*W0, C)
    summed = summed + upsampled_level(mem1_ref, pos1_ref, rh1_ref, rwb1_ref)
    summed = summed + upsampled_level(mem2_ref, pos2_ref, rh2_ref, rwb2_ref)

    # conv1 (1x1): contract the channel dim of both operands (NT matmul) so the
    # result lands channels-first (C, rt*W0) with no explicit transpose.
    h = lax.dot_general(w1_ref[...], summed.astype(mm_dtype),
                        dimension_numbers=(((1,), (1,)), ((), ())),
                        preferred_element_type=f32)
    h = jnp.maximum(h + b1_ref[...], 0.0)

    # conv2 (1x1): plain matmul -> lane-dense (Cout, rt*W0) result.
    out = jnp.dot(w2_ref[...], h.astype(mm_dtype),
                  preferred_element_type=f32) + b2_ref[...]

    # F.normalize(p=2, dim=channel): x / max(||x||, 1e-12)  (rsqrt -> EUP slot).
    ssq = jnp.sum(out * out, axis=0, keepdims=True)
    out = out * lax.rsqrt(jnp.maximum(ssq, 1e-24))
    o_ref[0] = out.astype(o_ref.dtype)


# ---------------------------------------------------------------------------
# Row-tile selection (VMEM-aware, handles H0 not divisible by the tile).
# ---------------------------------------------------------------------------
def _pad8(n):
    return ((n + 7) // 8) * 8


def _pad128(n):
    return ((n + 127) // 128) * 128


def _vmem_bytes_estimate(rt, W0, c_in, c_out, hw1, hw2, in_itemsize):
    (h1, w1), (h2, w2) = hw1, hw2
    cols = rt * W0
    est = 0
    est += 2 * 2 * _pad8(cols) * _pad128(c_in) * in_itemsize          # lvl0 mem/pos (x2 buf)
    est += 2 * (_pad8(h1) * _pad128(w1 * c_in)
                + _pad8(h2) * _pad128(w2 * c_in)) * in_itemsize       # lvl1/2 slabs (x1 buf)
    est += 2 * _pad8(rt) * (_pad128(h1) + _pad128(h2)) * 4            # rh tiles (x2 buf)
    est += rt * (_pad8(W0) * (_pad128(w1) + _pad128(w2))) * 4         # rw broadcasts (x1 buf)
    est += 2 * _pad8(c_out) * _pad128(cols) * 4                       # output tile (x2 buf)
    est += (_pad8(c_in) + _pad8(c_out)) * _pad128(c_in) * 4           # conv weights
    est += 6 * _pad8(cols) * _pad128(c_in) * 4                        # live f32 intermediates
    return est


def _row_tile_candidates(H0, W0, slack_tokens):
    """rt % 8 == 0, (rt*W0) % 128 == 0, padded level-0 reads stay in bounds."""
    lane_step = 128 // math.gcd(W0, 128)
    base = lane_step * 8 // math.gcd(lane_step, 8)                    # lcm(lane_step, 8)
    cands = []
    rt = base
    while rt < H0 + base:
        if ((-H0) % rt) * W0 <= slack_tokens:
            cands.append(rt)
        rt += base
    if not cands:
        if (H0 * W0) % 8 == 0:
            cands.append(H0)                                          # whole-image fallback
        else:
            raise ValueError(f"no (8,128)-legal row tiling for hw_lvl[0]={(H0, W0)}")
    return cands


# ---------------------------------------------------------------------------
# Public wrapper.
# ---------------------------------------------------------------------------
def memory_proj_forward(memory, memory_pos, memory_mask, hw_lvl, params, *,
                        max_tile_cols=4096, matmul_dtype=jnp.bfloat16):
    """_MemoryProj forward (norm='l2'). Returns NCHW (B, Cout, H0, W0)."""
    del memory_mask                          # unused by the reference forward pass
    # TODO(synk): only the default norm='l2' head is implemented; the 'tanh' /
    # None variants would replace the final normalize with tanh / identity.
    hw_lvl = [tuple(int(v) for v in x) for x in hw_lvl[:3]]
    (H0, W0), (h1, w1), (h2, w2) = hw_lvl
    bsz, n_mem, c_in = memory.shape
    n0, n1, n2 = H0 * W0, h1 * w1, h2 * w2
    assert n_mem == n0 + n1 + n2, (memory.shape, hw_lvl)

    wt1, bs1, wt2, bs2 = params              # PyTorch layout: (out, in), (out,)
    c_out = wt2.shape[0]

    # --- VMEM budget (v5e/v6e: 128 MiB physical, v7x: 64 MiB) -----------------
    try:
        vmem_cap = int(pltpu.get_tpu_info().vmem_capacity_bytes)
    except Exception:                         # conservative (v7x-sized) default
        vmem_cap = 64 * 1024 * 1024
    vmem_limit = min(int(vmem_cap * 0.8), 112 * 1024 * 1024)

    # --- choose the row tile ---------------------------------------------------
    in_itemsize = jnp.dtype(memory.dtype).itemsize
    cands = _row_tile_candidates(H0, W0, n1 + n2)
    fitting = [rt for rt in cands
               if rt * W0 <= max_tile_cols
               and _vmem_bytes_estimate(rt, W0, c_in, c_out, (h1, w1), (h2, w2),
                                        in_itemsize) <= int(0.75 * vmem_limit)]
    pool = fitting if fitting else [min(cands)]
    if bsz == 1:                              # keep both v7x TensorCores busy
        multi = [rt for rt in pool if -(-H0 // rt) >= 2]
        if multi:
            pool = multi
    rt = max(pool)
    n_tiles = -(-H0 // rt)
    H0_pad = n_tiles * rt
    tile_cols = rt * W0
    n0_pad = H0_pad * W0

    # --- small, grid-invariant operands ----------------------------------------
    f32 = jnp.float32
    rh1 = _bilinear_matrix_1d(H0, h1)
    rh2 = _bilinear_matrix_1d(H0, h2)
    if H0_pad != H0:                          # padded rows: clamp (sliced off below)
        rh1 = jnp.pad(rh1, ((0, H0_pad - H0), (0, 0)), mode='edge')
        rh2 = jnp.pad(rh2, ((0, H0_pad - H0), (0, 0)), mode='edge')
    # Per-tile-row broadcast of the width operator: makes the in-kernel column
    # resize a canonical batched matmul with no in-kernel broadcast.
    rwb1 = jnp.broadcast_to(_bilinear_matrix_1d(W0, w1), (rt, W0, w1))
    rwb2 = jnp.broadcast_to(_bilinear_matrix_1d(W0, w2), (rt, W0, w2))

    w1m = wt1.astype(matmul_dtype)
    w2m = wt2.astype(matmul_dtype)
    b1c = bs1.reshape(c_in, 1).astype(f32)
    b2c = bs2.reshape(c_out, 1).astype(f32)

    # Level-1/2 token slabs viewed (B, h, w*C) (contiguous -> free reshapes).
    # Level 0 (the dominant stream) is read directly from the full (B, nMem, C)
    # arrays -- no wrapper add/slice pass for it.
    mem1 = memory[:, n0:n0 + n1, :].reshape(bsz, h1, w1 * c_in)
    pos1 = memory_pos[:, n0:n0 + n1, :].reshape(bsz, h1, w1 * c_in)
    mem2 = memory[:, n0 + n1:, :].reshape(bsz, h2, w2 * c_in)
    pos2 = memory_pos[:, n0 + n1:, :].reshape(bsz, h2, w2 * c_in)

    def _single_buffered(shape, index_map):
        # Grid-invariant operands: one VMEM buffer is enough (frees VMEM, most
        # valuable on v7x).  Fall back to the default double-buffered spec if
        # this JAX build lacks BlockSpec(pipeline_mode=...).
        try:
            return pl.BlockSpec(shape, index_map, pipeline_mode=pl.Buffered(1))
        except Exception:                     # narrowly scoped: constructor only
            return pl.BlockSpec(shape, index_map)

    grid_spec = pltpu.PrefetchScalarGridSpec(
        num_scalar_prefetch=0,
        grid=(bsz, n_tiles),
        in_specs=[
            pl.BlockSpec((1, tile_cols, c_in), lambda b, t: (b, t, 0)),    # memory  (lvl0)
            pl.BlockSpec((1, tile_cols, c_in), lambda b, t: (b, t, 0)),    # pos     (lvl0)
            _single_buffered((1, h1, w1 * c_in), lambda b, t: (b, 0, 0)),  # memory  lvl1
            _single_buffered((1, h1, w1 * c_in), lambda b, t: (b, 0, 0)),  # pos     lvl1
            _single_buffered((1, h2, w2 * c_in), lambda b, t: (b, 0, 0)),  # memory  lvl2
            _single_buffered((1, h2, w2 * c_in), lambda b, t: (b, 0, 0)),  # pos     lvl2
            pl.BlockSpec((rt, h1), lambda b, t: (t, 0)),                   # rh1 tile rows
            pl.BlockSpec((rt, h2), lambda b, t: (t, 0)),                   # rh2 tile rows
            _single_buffered((rt, W0, w1), lambda b, t: (0, 0, 0)),        # rw1 (broadcast)
            _single_buffered((rt, W0, w2), lambda b, t: (0, 0, 0)),        # rw2 (broadcast)
            _single_buffered((c_in, c_in), lambda b, t: (0, 0)),           # conv1 weight
            _single_buffered((c_in, 1), lambda b, t: (0, 0)),              # conv1 bias
            _single_buffered((c_out, c_in), lambda b, t: (0, 0)),          # conv2 weight
            _single_buffered((c_out, 1), lambda b, t: (0, 0)),             # conv2 bias
        ],
        out_specs=pl.BlockSpec((1, c_out, tile_cols), lambda b, t: (b, 0, t)),
    )

    out_flat = pl.pallas_call(
        _memory_proj_kernel,
        out_shape=jax.ShapeDtypeStruct((bsz, c_out, n0_pad), jnp.float32),
        grid_spec=grid_spec,
        compiler_params=pltpu.CompilerParams(
            dimension_semantics=("parallel", "parallel"),
            vmem_limit_bytes=vmem_limit),
    )(memory, memory_pos, mem1, pos1, mem2, pos2,
      rh1, rh2, rwb1, rwb2, w1m, b1c, w2m, b2c)

    if n0_pad != n0:
        out_flat = out_flat[:, :, :n0]
    # Already NCHW-flat: this reshape is free (no transpose HBM pass).
    return out_flat.reshape(bsz, c_out, H0, W0)


# ---------------------------------------------------------------------------
# Pure-JAX reference (dense-kron resize, channels-last, f32): independent path.
# ---------------------------------------------------------------------------
def memory_proj_reference(memory, memory_pos, hw_lvl, params):
    hw_lvl = [tuple(int(v) for v in x) for x in hw_lvl[:3]]
    bsz = memory.shape[0]
    mwp = (memory + memory_pos).astype(jnp.float32)
    sizes = [h * w for h, w in hw_lvl]
    begin, levels = 0, []
    for s in sizes:
        levels.append(mwp[:, begin:begin + s, :])
        begin += s
    H0, W0 = hw_lvl[0]
    summed = levels[0]
    for lvl_x, lvl_hw in zip(levels[1:], hw_lvl[1:]):
        m = _bilinear_matrix_2d(hw_lvl[0], lvl_hw)
        summed = summed + jnp.einsum("pq,bqc->bpc", m, lvl_x)
    wt1, bs1, wt2, bs2 = params
    h = jnp.maximum(jnp.einsum("bpc,dc->bpd", summed, wt1) + bs1[None, None, :], 0.0)
    out = jnp.einsum("bpc,dc->bpd", h, wt2) + bs2[None, None, :]
    denom = jnp.maximum(jnp.sqrt(jnp.sum(out * out, -1, keepdims=True)), 1e-12)
    out = out / denom
    c_out = wt2.shape[0]
    return out.reshape(bsz, H0, W0, c_out).transpose(0, 3, 1, 2)


if __name__ == "__main__":
    key = jax.random.PRNGKey(0)
    k_mem, k_pos, k_w1, k_b1, k_w2, k_b2 = jax.random.split(key, 6)

    bsz = 2
    embed_dims = 32            # in_channels
    out_channels = 16
    hw_lvl = [(16, 16), (8, 8), (4, 4)]
    n_mem = sum(h * w for h, w in hw_lvl)    # 336

    memory = jax.random.normal(k_mem, (bsz, n_mem, embed_dims), jnp.float32)
    memory_pos = jax.random.normal(k_pos, (bsz, n_mem, embed_dims), jnp.float32)
    memory_mask = jnp.zeros((bsz, n_mem), jnp.bool_)    # unused in the forward

    # 1x1-conv params in native PyTorch layout: weight (out_ch, in_ch), bias (out_ch,)
    w1 = jax.random.normal(k_w1, (embed_dims, embed_dims), jnp.float32) * 0.1
    b1 = jax.random.normal(k_b1, (embed_dims,), jnp.float32) * 0.1
    w2 = jax.random.normal(k_w2, (out_channels, embed_dims), jnp.float32) * 0.1
    b2 = jax.random.normal(k_b2, (out_channels,), jnp.float32) * 0.1
    params = (w1, b1, w2, b2)

    ref = memory_proj_reference(memory, memory_pos, hw_lvl, params)

    # 1) f32 matmuls + small row cap -> exercises the multi-tile grid (2 x 2),
    #    checked at tight tolerance (validates the resize/index algebra exactly).
    out_f32 = memory_proj_forward(memory, memory_pos, memory_mask, hw_lvl, params,
                                  max_tile_cols=128, matmul_dtype=jnp.float32)
    out_f32 = jax.block_until_ready(out_f32)
    assert out_f32.shape == (bsz, out_channels, hw_lvl[0][0], hw_lvl[0][1])
    assert jnp.allclose(out_f32, ref, atol=1e-4, rtol=1e-4), \
        float(jnp.max(jnp.abs(out_f32 - ref)))

    # 2) default config: bf16 MXU operands, single row tile per batch element.
    #    Looser tolerance due to bf16 conv operands (layout/index bugs would
    #    still show up as O(1) errors).
    out_bf16 = jax.block_until_ready(
        memory_proj_forward(memory, memory_pos, memory_mask, hw_lvl, params))
    assert out_bf16.shape == (bsz, out_channels, hw_lvl[0][0], hw_lvl[0][1])
    assert jnp.allclose(out_bf16, ref, atol=4e-2, rtol=4e-2), \
        float(jnp.max(jnp.abs(out_bf16 - ref)))

    print("KERNEL_OK")
</pallas_src>

<mosaic_0001>
module attributes {stable_mosaic.version = 11 : i64} {
  func.func @_memory_proj_kernel(%arg0: i32, %arg1: i32, %arg2: memref<1x128x32xf32, #tpu.memory_space<vmem>>, %arg3: memref<1x128x32xf32, #tpu.memory_space<vmem>>, %arg4: memref<1x8x256xf32, #tpu.memory_space<vmem>>, %arg5: memref<1x8x256xf32, #tpu.memory_space<vmem>>, %arg6: memref<1x4x128xf32, #tpu.memory_space<vmem>>, %arg7: memref<1x4x128xf32, #tpu.memory_space<vmem>>, %arg8: memref<8x8xf32, #tpu.memory_space<vmem>>, %arg9: memref<8x4xf32, #tpu.memory_space<vmem>>, %arg10: memref<8x16x8xf32, #tpu.memory_space<vmem>>, %arg11: memref<8x16x4xf32, #tpu.memory_space<vmem>>, %arg12: memref<32x32xf32, #tpu.memory_space<vmem>>, %arg13: memref<32x1xf32, #tpu.memory_space<vmem>>, %arg14: memref<16x32xf32, #tpu.memory_space<vmem>>, %arg15: memref<16x1xf32, #tpu.memory_space<vmem>>, %arg16: memref<1x16x128xf32, #tpu.memory_space<vmem>>) attributes {dimension_semantics = [#tpu.dimension_semantics<parallel>, #tpu.dimension_semantics<parallel>], iteration_bounds = array<i64: 2, 2>, scalar_prefetch = 0 : i64, scratch_operands = 0 : i64, tpu.core_type = #tpu.core_type<tc>, window_params = [{transform_indices = @transform_0, window_bounds = array<i64: 1, 128, 32>}, {transform_indices = @transform_1, window_bounds = array<i64: 1, 128, 32>}, {pipeline_mode = #tpu.pipeline_mode<synchronous>, transform_indices = @transform_2, window_bounds = array<i64: 1, 8, 256>}, {pipeline_mode = #tpu.pipeline_mode<synchronous>, transform_indices = @transform_3, window_bounds = array<i64: 1, 8, 256>}, {pipeline_mode = #tpu.pipeline_mode<synchronous>, transform_indices = @transform_4, window_bounds = array<i64: 1, 4, 128>}, {pipeline_mode = #tpu.pipeline_mode<synchronous>, transform_indices = @transform_5, window_bounds = array<i64: 1, 4, 128>}, {transform_indices = @transform_6, window_bounds = array<i64: 8, 8>}, {transform_indices = @transform_7, window_bounds = array<i64: 8, 4>}, {pipeline_mode = #tpu.pipeline_mode<synchronous>, transform_indices = @transform_8, window_bounds = array<i64: 8, 16, 8>}, {pipeline_mode = #tpu.pipeline_mode<synchronous>, transform_indices = @transform_9, window_bounds = array<i64: 8, 16, 4>}, {pipeline_mode = #tpu.pipeline_mode<synchronous>, transform_indices = @transform_10, window_bounds = array<i64: 32, 32>}, {pipeline_mode = #tpu.pipeline_mode<synchronous>, transform_indices = @transform_11, window_bounds = array<i64: 32, 1>}, {pipeline_mode = #tpu.pipeline_mode<synchronous>, transform_indices = @transform_12, window_bounds = array<i64: 16, 32>}, {pipeline_mode = #tpu.pipeline_mode<synchronous>, transform_indices = @transform_13, window_bounds = array<i64: 16, 1>}, {transform_indices = @transform_14, window_bounds = array<i64: 1, 16, 128>}]} {
    %c0 = arith.constant 0 : index
    %c0_0 = arith.constant 0 : index
    %c0_1 = arith.constant 0 : index
    %0 = vector.load %arg2[%c0, %c0_0, %c0_1] : memref<1x128x32xf32, #tpu.memory_space<vmem>>, vector<1x128x32xf32>
    %1 = vector.shape_cast %0 : vector<1x128x32xf32> to vector<128x32xf32>
    %c0_2 = arith.constant 0 : index
    %c0_3 = arith.constant 0 : index
    %c0_4 = arith.constant 0 : index
    %2 = vector.load %arg3[%c0_2, %c0_3, %c0_4] : memref<1x128x32xf32, #tpu.memory_space<vmem>>, vector<1x128x32xf32>
    %3 = vector.shape_cast %2 : vector<1x128x32xf32> to vector<128x32xf32>
    %4 = arith.addf %1, %3 : vector<128x32xf32>
    %c0_5 = arith.constant 0 : index
    %c0_6 = arith.constant 0 : index
    %c0_7 = arith.constant 0 : index
    %5 = vector.load %arg4[%c0_5, %c0_6, %c0_7] : memref<1x8x256xf32, #tpu.memory_space<vmem>>, vector<1x8x256xf32>
    %6 = vector.shape_cast %5 : vector<1x8x256xf32> to vector<8x256xf32>
    %c0_8 = arith.constant 0 : index
    %c0_9 = arith.constant 0 : index
    %c0_10 = arith.constant 0 : index
    %7 = vector.load %arg5[%c0_8, %c0_9, %c0_10] : memref<1x8x256xf32, #tpu.memory_space<vmem>>, vector<1x8x256xf32>
    %8 = vector.shape_cast %7 : vector<1x8x256xf32> to vector<8x256xf32>
    %9 = arith.addf %6, %8 : vector<8x256xf32>
    %c0_11 = arith.constant 0 : index
    %c0_12 = arith.constant 0 : index
    %10 = vector.load %arg8[%c0_11, %c0_12] : memref<8x8xf32, #tpu.memory_space<vmem>>, vector<8x8xf32>
    %cst = arith.constant dense<0.000000e+00> : vector<8x256xf32>
    %11 = tpu.matmul %10, %9, %cst {dimension_numbers = #tpu.dot_dimension_numbers<[1], [0], [0], [1], [0, 0, 1, 1], [], []>} : vector<8x8xf32>, vector<8x256xf32>, vector<8x256xf32> -> vector<8x256xf32>
    %12 = vector.shape_cast %11 : vector<8x256xf32> to vector<8x8x32xf32>
    %c0_13 = arith.constant 0 : index
    %c0_14 = arith.constant 0 : index
    %c0_15 = arith.constant 0 : index
    %13 = vector.load %arg10[%c0_13, %c0_14, %c0_15] : memref<8x16x8xf32, #tpu.memory_space<vmem>>, vector<8x16x8xf32>
    "tpu.trace_start"() <{level = 10 : i32, message = "rWw,rwc->rWc"}> : () -> ()
    %cst_16 = arith.constant dense<0.000000e+00> : vector<8x16x32xf32>
    %14 = tpu.matmul %13, %12, %cst_16 {dimension_numbers = #tpu.dot_dimension_numbers<[2], [1], [1], [2], [0, 0, 0, 1, 1, 2], [0], [0]>} : vector<8x16x8xf32>, vector<8x8x32xf32>, vector<8x16x32xf32> -> vector<8x16x32xf32>
    "tpu.trace_stop"() : () -> ()
    %15 = vector.shape_cast %14 : vector<8x16x32xf32> to vector<128x32xf32>
    %16 = arith.addf %4, %15 : vector<128x32xf32>
    %c0_17 = arith.constant 0 : index
    %c0_18 = arith.constant 0 : index
    %c0_19 = arith.constant 0 : index
    %17 = vector.load %arg6[%c0_17, %c0_18, %c0_19] : memref<1x4x128xf32, #tpu.memory_space<vmem>>, vector<1x4x128xf32>
    %18 = vector.shape_cast %17 : vector<1x4x128xf32> to vector<4x128xf32>
    %c0_20 = arith.constant 0 : index
    %c0_21 = arith.constant 0 : index
    %c0_22 = arith.constant 0 : index
    %19 = vector.load %arg7[%c0_20, %c0_21, %c0_22] : memref<1x4x128xf32, #tpu.memory_space<vmem>>, vector<1x4x128xf32>
    %20 = vector.shape_cast %19 : vector<1x4x128xf32> to vector<4x128xf32>
    %21 = arith.addf %18, %20 : vector<4x128xf32>
    %c0_23 = arith.constant 0 : index
    %c0_24 = arith.constant 0 : index
    %22 = vector.load %arg9[%c0_23, %c0_24] : memref<8x4xf32, #tpu.memory_space<vmem>>, vector<8x4xf32>
    %cst_25 = arith.constant dense<0.000000e+00> : vector<8x128xf32>
    %23 = tpu.matmul %22, %21, %cst_25 {dimension_numbers = #tpu.dot_dimension_numbers<[1], [0], [0], [1], [0, 0, 1, 1], [], []>} : vector<8x4xf32>, vector<4x128xf32>, vector<8x128xf32> -> vector<8x128xf32>
    %24 = vector.shape_cast %23 : vector<8x128xf32> to vector<8x4x32xf32>
    %c0_26 = arith.constant 0 : index
    %c0_27 = arith.constant 0 : index
    %c0_28 = arith.constant 0 : index
    %25 = vector.load %arg11[%c0_26, %c0_27, %c0_28] : memref<8x16x4xf32, #tpu.memory_space<vmem>>, vector<8x16x4xf32>
    "tpu.trace_start"() <{level = 10 : i32, message = "rWw,rwc->rWc"}> : () -> ()
    %cst_29 = arith.constant dense<0.000000e+00> : vector<8x16x32xf32>
    %26 = tpu.matmul %25, %24, %cst_29 {dimension_numbers = #tpu.dot_dimension_numbers<[2], [1], [1], [2], [0, 0, 0, 1, 1, 2], [0], [0]>} : vector<8x16x4xf32>, vector<8x4x32xf32>, vector<8x16x32xf32> -> vector<8x16x32xf32>
    "tpu.trace_stop"() : () -> ()
    %27 = vector.shape_cast %26 : vector<8x16x32xf32> to vector<128x32xf32>
    %28 = arith.addf %16, %27 : vector<128x32xf32>
    %c0_30 = arith.constant 0 : index
    %c0_31 = arith.constant 0 : index
    %29 = vector.load %arg12[%c0_30, %c0_31] : memref<32x32xf32, #tpu.memory_space<vmem>>, vector<32x32xf32>
    %cst_32 = arith.constant dense<0.000000e+00> : vector<32x128xf32>
    %30 = tpu.matmul %29, %28, %cst_32 {dimension_numbers = #tpu.dot_dimension_numbers<[1], [1], [0], [0], [0, 0, 1, 0], [], []>} : vector<32x32xf32>, vector<128x32xf32>, vector<32x128xf32> -> vector<32x128xf32>
    %c0_33 = arith.constant 0 : index
    %c0_34 = arith.constant 0 : index
    %31 = vector.load %arg13[%c0_33, %c0_34] : memref<32x1xf32, #tpu.memory_space<vmem>>, vector<32x1xf32>
    %32 = vector.broadcast %31 : vector<32x1xf32> to vector<32x128xf32>
    %33 = arith.addf %30, %32 : vector<32x128xf32>
    %cst_35 = arith.constant 0.000000e+00 : f32
    %34 = vector.broadcast %cst_35 : f32 to vector<32x128xf32>
    %35 = arith.maximumf %33, %34 : vector<32x128xf32>
    %c0_36 = arith.constant 0 : index
    %c0_37 = arith.constant 0 : index
    %36 = vector.load %arg14[%c0_36, %c0_37] : memref<16x32xf32, #tpu.memory_space<vmem>>, vector<16x32xf32>
    %cst_38 = arith.constant dense<0.000000e+00> : vector<16x128xf32>
    %37 = tpu.matmul %36, %35, %cst_38 {dimension_numbers = #tpu.dot_dimension_numbers<[1], [0], [0], [1], [0, 0, 1, 1], [], []>} : vector<16x32xf32>, vector<32x128xf32>, vector<16x128xf32> -> vector<16x128xf32>
    %c0_39 = arith.constant 0 : index
    %c0_40 = arith.constant 0 : index
    %38 = vector.load %arg15[%c0_39, %c0_40] : memref<16x1xf32, #tpu.memory_space<vmem>>, vector<16x1xf32>
    %39 = vector.broadcast %38 : vector<16x1xf32> to vector<16x128xf32>
    %40 = arith.addf %37, %39 : vector<16x128xf32>
    %41 = arith.mulf %40, %40 : vector<16x128xf32>
    %cst_41 = arith.constant dense<0.000000e+00> : vector<128xf32>
    %42 = vector.multi_reduction <add>, %41, %cst_41 [0] : vector<16x128xf32> to vector<128xf32>
    %43 = vector.shape_cast %42 : vector<128xf32> to vector<1x128xf32>
    %cst_42 = arith.constant 1.000000e-24 : f32
    %44 = vector.broadcast %cst_42 : f32 to vector<1x128xf32>
    %45 = arith.maximumf %43, %44 : vector<1x128xf32>
    %46 = math.rsqrt %45 : vector<1x128xf32>
    %47 = vector.broadcast %46 : vector<1x128xf32> to vector<16x128xf32>
    %48 = arith.mulf %40, %47 : vector<16x128xf32>
    %c0_43 = arith.constant 0 : index
    %c0_44 = arith.constant 0 : index
    %c0_45 = arith.constant 0 : index
    %49 = vector.load %arg16[%c0_43, %c0_44, %c0_45] : memref<1x16x128xf32, #tpu.memory_space<vmem>>, vector<1x16x128xf32>
    %50 = vector.shape_cast %49 : vector<1x16x128xf32> to vector<16x128xf32>
    %51 = vector.shape_cast %48 : vector<16x128xf32> to vector<1x16x128xf32>
    tpu.vector_store %arg16[%c0_43, %c0_44, %c0_45], %51 {strides = array<i32>} : memref<1x16x128xf32, #tpu.memory_space<vmem>>, vector<1x16x128xf32>,
    return
  }
  func.func @transform_0(%arg0: i32, %arg1: i32) -> (i32, i32, i32) {
    %c0_i32 = arith.constant 0 : i32
    %c0_i32_0 = arith.constant 0 : i32
    return %arg0, %arg1, %c0_i32 : i32, i32, i32
  }
  func.func @transform_1(%arg0: i32, %arg1: i32) -> (i32, i32, i32) {
    %c0_i32 = arith.constant 0 : i32
    %c0_i32_0 = arith.constant 0 : i32
    return %arg0, %arg1, %c0_i32 : i32, i32, i32
  }
  func.func @transform_2(%arg0: i32, %arg1: i32) -> (i32, i32, i32) {
    %c0_i32 = arith.constant 0 : i32
    %c0_i32_0 = arith.constant 0 : i32
    %c0_i32_1 = arith.constant 0 : i32
    return %arg0, %c0_i32, %c0_i32_0 : i32, i32, i32
  }
  func.func @transform_3(%arg0: i32, %arg1: i32) -> (i32, i32, i32) {
    %c0_i32 = arith.constant 0 : i32
    %c0_i32_0 = arith.constant 0 : i32
    %c0_i32_1 = arith.constant 0 : i32
    return %arg0, %c0_i32, %c0_i32_0 : i32, i32, i32
  }
  func.func @transform_4(%arg0: i32, %arg1: i32) -> (i32, i32, i32) {
    %c0_i32 = arith.constant 0 : i32
    %c0_i32_0 = arith.constant 0 : i32
    %c0_i32_1 = arith.constant 0 : i32
    return %arg0, %c0_i32, %c0_i32_0 : i32, i32, i32
  }
  func.func @transform_5(%arg0: i32, %arg1: i32) -> (i32, i32, i32) {
    %c0_i32 = arith.constant 0 : i32
    %c0_i32_0 = arith.constant 0 : i32
    %c0_i32_1 = arith.constant 0 : i32
    return %arg0, %c0_i32, %c0_i32_0 : i32, i32, i32
  }
  func.func @transform_6(%arg0: i32, %arg1: i32) -> (i32, i32) {
    %c0_i32 = arith.constant 0 : i32
    %c0_i32_0 = arith.constant 0 : i32
    return %arg1, %c0_i32 : i32, i32
  }
  func.func @transform_7(%arg0: i32, %arg1: i32) -> (i32, i32) {
    %c0_i32 = arith.constant 0 : i32
    %c0_i32_0 = arith.constant 0 : i32
    return %arg1, %c0_i32 : i32, i32
  }
  func.func @transform_8(%arg0: i32, %arg1: i32) -> (i32, i32, i32) {
    %c0_i32 = arith.constant 0 : i32
    %c0_i32_0 = arith.constant 0 : i32
    %c0_i32_1 = arith.constant 0 : i32
    %c0_i32_2 = arith.constant 0 : i32
    return %c0_i32, %c0_i32_0, %c0_i32_1 : i32, i32, i32
  }
  func.func @transform_9(%arg0: i32, %arg1: i32) -> (i32, i32, i32) {
    %c0_i32 = arith.constant 0 : i32
    %c0_i32_0 = arith.constant 0 : i32
    %c0_i32_1 = arith.constant 0 : i32
    %c0_i32_2 = arith.constant 0 : i32
    return %c0_i32, %c0_i32_0, %c0_i32_1 : i32, i32, i32
  }
  func.func @transform_10(%arg0: i32, %arg1: i32) -> (i32, i32) {
    %c0_i32 = arith.constant 0 : i32
    %c0_i32_0 = arith.constant 0 : i32
    %c0_i32_1 = arith.constant 0 : i32
    return %c0_i32, %c0_i32_0 : i32, i32
  }
  func.func @transform_11(%arg0: i32, %arg1: i32) -> (i32, i32) {
    %c0_i32 = arith.constant 0 : i32
    %c0_i32_0 = arith.constant 0 : i32
    %c0_i32_1 = arith.constant 0 : i32
    return %c0_i32, %c0_i32_0 : i32, i32
  }
  func.func @transform_12(%arg0: i32, %arg1: i32) -> (i32, i32) {
    %c0_i32 = arith.constant 0 : i32
    %c0_i32_0 = arith.constant 0 : i32
    %c0_i32_1 = arith.constant 0 : i32
    return %c0_i32, %c0_i32_0 : i32, i32
  }
  func.func @transform_13(%arg0: i32, %arg1: i32) -> (i32, i32) {
    %c0_i32 = arith.constant 0 : i32
    %c0_i32_0 = arith.constant 0 : i32
    %c0_i32_1 = arith.constant 0 : i32
    return %c0_i32, %c0_i32_0 : i32, i32
  }
  func.func @transform_14(%arg0: i32, %arg1: i32) -> (i32, i32, i32) {
    %c0_i32 = arith.constant 0 : i32
    %c0_i32_0 = arith.constant 0 : i32
    return %arg0, %c0_i32, %arg1 : i32, i32, i32
  }
}

</mosaic_0001>

<llo_original>
// kernel: tpu_custom_call.1
$region0: #{tpu_custom_call.1}
  #allocation0 [shape = 'u32[]', space=smem, size = 0x4, offset = 0x4, fixed_abs, tag = 'smem constant byte address 0x4 - core index']
  #allocation1 [shape = 'u32[144,128]{1,0:T(1,128)}', space=vmem, size = 0x12000, scoped, tag = 'internal scratch']
  %s0 = inlined_call_operand.vmem [shape: f32[2,336,32], index: 0, kind: input, shape index: {}]
  %s1 = inlined_call_operand.vmem [shape: f32[2,336,32], index: 1, kind: input, shape index: {}]
  %s2 = inlined_call_operand.vmem [shape: f32[2,8,256], index: 2, kind: input, shape index: {}]
  %s3 = inlined_call_operand.vmem [shape: f32[2,8,256], index: 3, kind: input, shape index: {}]
  %s4 = inlined_call_operand.vmem [shape: f32[2,4,128], index: 4, kind: input, shape index: {}]
  %s5 = inlined_call_operand.vmem [shape: f32[2,4,128], index: 5, kind: input, shape index: {}]
  %s6 = inlined_call_operand.vmem [shape: f32[16,8], index: 6, kind: input, shape index: {}]
  %s7 = inlined_call_operand.vmem [shape: f32[16,4], index: 7, kind: input, shape index: {}]
  %s8 = inlined_call_operand.vmem [shape: f32[8,16,8], index: 8, kind: input, shape index: {}]
  %s9 = inlined_call_operand.vmem [shape: f32[8,16,4], index: 9, kind: input, shape index: {}]
  %s10 = inlined_call_operand.vmem [shape: f32[32,32], index: 10, kind: input, shape index: {}]
  %s11 = inlined_call_operand.vmem [shape: f32[32,1], index: 11, kind: input, shape index: {}]
  %s12 = inlined_call_operand.vmem [shape: f32[16,32], index: 12, kind: input, shape index: {}]
  %s13 = inlined_call_operand.vmem [shape: f32[16,1], index: 13, kind: input, shape index: {}]
  %s14 = inlined_call_operand.hbm [shape: f32[2,16,256], index: 14, kind: output, shape index: {}]
  %s15 = sld [smem:[#allocation0]]
  $region89: #{tpu_custom_call.1} parent=0
    _
  %s17 = ssub.s32 1, %s15
  %s18 = scalar_select 0, %s17, %s15
  $region1: #{tpu_custom_call.1} parent=0
    #allocation2 [shape = 'u8[16384]{0}', space=vmem, size = 0x4000, scoped, tag = 'output window, operand 0']
    #allocation3 [shape = 's32[2]{0}', space=sflag, size = 0x8, scoped, tag = 'scoped memory for tpu_custom_call.1']
    %19 = vsyncpa [#allocation3], 0
    %s20 = scalar_lea.sflag [#allocation3], 1
    %21 = vsyncpa %s20, 0
    loop: start=0, step=1, limit=6
    $region2: #{tpu_custom_call.1} parent=1 // loop_pre_header
      _
    $region3: #{tpu_custom_call.1} parent=1 // loop_header
      %s23 = sphi 0, %s27
      %p24 = scmp.ge.s32.totalorder %s23, 6
      %s30 = sphi 0, %s42
      %s31 = sphi 0, %s38
      %s32 = sphi 0, %s30
      %s33 = sphi 0, %s31
      %s34 = sphi 0, %s32
      %s35 = sphi 0, %s33
      %s47 = sphi 0, %s49
      %s50 = sphi 0, %s47
      %s51 = sphi 0, %s50
      %s67 = sphi 0, %s51
      %s75 = sphi 0, %s77
      %s78 = sphi 0, %s75
      %s79 = sphi 0, %s78
      %s95 = sphi 0, %s79
      %s101 = sphi 0, %s103
      %s104 = sphi 0, %s101
      %s105 = sphi 0, %s104
      %s121 = sphi 0, %s105
      %s127 = sphi 0, %s129
      %s130 = sphi 0, %s127
      %s131 = sphi 0, %s130
      %s147 = sphi 0, %s131
      %s153 = sphi 0, %s155
      %s156 = sphi 0, %s153
      %s157 = sphi 0, %s156
      %s173 = sphi 0, %s157
      %s179 = sphi 0, %s181
      %s182 = sphi 0, %s179
      %s183 = sphi 0, %s182
      %s199 = sphi 0, %s183
      %s205 = sphi 0, %s207
      %s208 = sphi 0, %s205
      %s209 = sphi 0, %s208
      %s225 = sphi 0, %s209
      %s231 = sphi 0, %s233
      %s234 = sphi 0, %s231
      %s235 = sphi 0, %s234
      %s251 = sphi 0, %s235
      %s255 = sphi 0, %s255
      %s257 = sphi 0, %s255
      %s258 = sphi 0, %s257
      %s272 = sphi 0, %s258
      %s276 = sphi 0, %s276
      %s278 = sphi 0, %s276
      %s279 = sphi 0, %s278
      %s293 = sphi 0, %s279
      %s297 = sphi 0, %s297
      %s299 = sphi 0, %s297
      %s300 = sphi 0, %s299
      %s314 = sphi 0, %s300
      %s318 = sphi 0, %s318
      %s320 = sphi 0, %s318
      %s321 = sphi 0, %s320
      %s335 = sphi 0, %s321
      %s339 = sphi 0, %s339
      %s341 = sphi 0, %s339
      %s342 = sphi 0, %s341
      %s356 = sphi 0, %s342
      %s360 = sphi 0, %s360
      %s362 = sphi 0, %s360
      %s363 = sphi 0, %s362
      %s377 = sphi 0, %s363
      %s385 = sphi 0, %s387
      %s388 = sphi 0, %s385
      %s389 = sphi 0, %s388
      %s405 = sphi 0, %s389
    $region4: #{tpu_custom_call.1} parent=1 // loop_header_branch
      %26 = sbr.rel (%p24) target = $region8
    $region5: #{tpu_custom_call.1} parent=1 // loop_body
      %s28 = ssub.s32 %s23, 1
      %s29 = ssub.s32 %s23, 2
      %s36 = sadd.s32 1, %s31
      %p37 = scmp.ge.s32.totalorder %s36, 2
      %s38 = scalar_select %p37, 0, %s36
      %s39 = sadd.s32 1, %s30
      %s40 = scalar_select %p37, %s39, %s30
      %p41 = scmp.ge.s32.totalorder %s40, 2
      %s42 = scalar_select %p41, 0, %s40
      %s43 = ssub.s32 %s30, %s42
      %s44 = ssub.s32 %s31, %s38
      %s45 = sor.u32 %s43, %s44
      %p46 = scmp.eq.s32.totalorder %s45, 0
      %s48 = sadd.s32 %s47, 1
      %s49 = scalar_select %p46, %s47, %s48
      %p52 = pneg %p46
      %p53 = scmp.eq.s32.totalorder %s23, 3
      %p54 = por %p52, %p53
      %p55 = scmp.ne.s32.totalorder %s47, %s50
      %p56 = scmp.eq.s32.totalorder %s23, 0
      %p57 = por %p55, %p56
      %p58 = scmp.ne.s32.totalorder %s47, %s50
      %p59 = scmp.eq.s32.totalorder %s28, 3
      %p60 = por %p58, %p59
      %p61 = scmp.ne.s32.totalorder %s50, %s51
      %p62 = scmp.eq.s32.totalorder %s28, 0
      %p63 = por %p61, %p62
      %p64 = scmp.ne.s32.totalorder %s50, %s51
      %p65 = scmp.eq.s32.totalorder %s29, 3
      %p66 = por %p64, %p65
      %p68 = scmp.ne.s32.totalorder %s51, %s67
      %p69 = scmp.eq.s32.totalorder %s29, 0
      %p70 = por %p68, %p69
      %s71 = ssub.s32 %s30, %s42
      %s72 = ssub.s32 %s31, %s38
      %s73 = sor.u32 %s71, %s72
      %p74 = scmp.eq.s32.totalorder %s73, 0
      %s76 = sadd.s32 %s75, 1
      %s77 = scalar_select %p74, %s75, %s76
      %p80 = pneg %p74
      %p81 = scmp.eq.s32.totalorder %s23, 3
      %p82 = por %p80, %p81
      %p83 = scmp.ne.s32.totalorder %s75, %s78
      %p84 = scmp.eq.s32.totalorder %s23, 0
      %p85 = por %p83, %p84
      %p86 = scmp.ne.s32.totalorder %s75, %s78
      %p87 = scmp.eq.s32.totalorder %s28, 3
      %p88 = por %p86, %p87
      %p89 = scmp.ne.s32.totalorder %s78, %s79
      %p90 = scmp.eq.s32.totalorder %s28, 0
      %p91 = por %p89, %p90
      %p92 = scmp.ne.s32.totalorder %s78, %s79
      %p93 = scmp.eq.s32.totalorder %s29, 3
      %p94 = por %p92, %p93
      %p96 = scmp.ne.s32.totalorder %s79, %s95
      %p97 = scmp.eq.s32.totalorder %s29, 0
      %p98 = por %p96, %p97
      %s99 = ssub.s32 %s30, %s42
      %p100 = scmp.eq.s32.totalorder %s99, 0
      %s102 = sadd.s32 %s101, 1
      %s103 = scalar_select %p100, %s101, %s102
      %p106 = pneg %p100
      %p107 = scmp.eq.s32.totalorder %s23, 3
      %p108 = por %p106, %p107
      %p109 = scmp.ne.s32.totalorder %s101, %s104
      %p110 = scmp.eq.s32.totalorder %s23, 0
      %p111 = por %p109, %p110
      %p112 = scmp.ne.s32.totalorder %s101, %s104
      %p113 = scmp.eq.s32.totalorder %s28, 3
      %p114 = por %p112, %p113
      %p115 = scmp.ne.s32.totalorder %s104, %s105
      %p116 = scmp.eq.s32.totalorder %s28, 0
      %p117 = por %p115, %p116
      %p118 = scmp.ne.s32.totalorder %s104, %s105
      %p119 = scmp.eq.s32.totalorder %s29, 3
      %p120 = por %p118, %p119
      %p122 = scmp.ne.s32.totalorder %s105, %s121
      %p123 = scmp.eq.s32.totalorder %s29, 0
      %p124 = por %p122, %p123
      %s125 = ssub.s32 %s30, %s42
      %p126 = scmp.eq.s32.totalorder %s125, 0
      %s128 = sadd.s32 %s127, 1
      %s129 = scalar_select %p126, %s127, %s128
      %p132 = pneg %p126
      %p133 = scmp.eq.s32.totalorder %s23, 3
      %p134 = por %p132, %p133
      %p135 = scmp.ne.s32.totalorder %s127, %s130
      %p136 = scmp.eq.s32.totalorder %s23, 0
      %p137 = por %p135, %p136
      %p138 = scmp.ne.s32.totalorder %s127, %s130
      %p139 = scmp.eq.s32.totalorder %s28, 3
      %p140 = por %p138, %p139
      %p141 = scmp.ne.s32.totalorder %s130, %s131
      %p142 = scmp.eq.s32.totalorder %s28, 0
      %p143 = por %p141, %p142
      %p144 = scmp.ne.s32.totalorder %s130, %s131
      %p145 = scmp.eq.s32.totalorder %s29, 3
      %p146 = por %p144, %p145
      %p148 = scmp.ne.s32.totalorder %s131, %s147
      %p149 = scmp.eq.s32.totalorder %s29, 0
      %p150 = por %p148, %p149
      %s151 = ssub.s32 %s30, %s42
      %p152 = scmp.eq.s32.totalorder %s151, 0
      %s154 = sadd.s32 %s153, 1
      %s155 = scalar_select %p152, %s153, %s154
      %p158 = pneg %p152
      %p159 = scmp.eq.s32.totalorder %s23, 3
      %p160 = por %p158, %p159
      %p161 = scmp.ne.s32.totalorder %s153, %s156
      %p162 = scmp.eq.s32.totalorder %s23, 0
      %p163 = por %p161, %p162
      %p164 = scmp.ne.s32.totalorder %s153, %s156
      %p165 = scmp.eq.s32.totalorder %s28, 3
      %p166 = por %p164, %p165
      %p167 = scmp.ne.s32.totalorder %s156, %s157
      %p168 = scmp.eq.s32.totalorder %s28, 0
      %p169 = por %p167, %p168
      %p170 = scmp.ne.s32.totalorder %s156, %s157
      %p171 = scmp.eq.s32.totalorder %s29, 3
      %p172 = por %p170, %p171
      %p174 = scmp.ne.s32.totalorder %s157, %s173
      %p175 = scmp.eq.s32.totalorder %s29, 0
      %p176 = por %p174, %p175
      %s177 = ssub.s32 %s30, %s42
      %p178 = scmp.eq.s32.totalorder %s177, 0
      %s180 = sadd.s32 %s179, 1
      %s181 = scalar_select %p178, %s179, %s180
      %p184 = pneg %p178
      %p185 = scmp.eq.s32.totalorder %s23, 3
      %p186 = por %p184, %p185
      %p187 = scmp.ne.s32.totalorder %s179, %s182
      %p188 = scmp.eq.s32.totalorder %s23, 0
      %p189 = por %p187, %p188
      %p190 = scmp.ne.s32.totalorder %s179, %s182
      %p191 = scmp.eq.s32.totalorder %s28, 3
      %p192 = por %p190, %p191
      %p193 = scmp.ne.s32.totalorder %s182, %s183
      %p194 = scmp.eq.s32.totalorder %s28, 0
      %p195 = por %p193, %p194
      %p196 = scmp.ne.s32.totalorder %s182, %s183
      %p197 = scmp.eq.s32.totalorder %s29, 3
      %p198 = por %p196, %p197
      %p200 = scmp.ne.s32.totalorder %s183, %s199
      %p201 = scmp.eq.s32.totalorder %s29, 0
      %p202 = por %p200, %p201
      %s203 = ssub.s32 %s31, %s38
      %p204 = scmp.eq.s32.totalorder %s203, 0
      %s206 = sadd.s32 %s205, 1
      %s207 = scalar_select %p204, %s205, %s206
      %p210 = pneg %p204
      %p211 = scmp.eq.s32.totalorder %s23, 3
      %p212 = por %p210, %p211
      %p213 = scmp.ne.s32.totalorder %s205, %s208
      %p214 = scmp.eq.s32.totalorder %s23, 0
      %p215 = por %p213, %p214
      %p216 = scmp.ne.s32.totalorder %s205, %s208
      %p217 = scmp.eq.s32.totalorder %s28, 3
      %p218 = por %p216, %p217
      %p219 = scmp.ne.s32.totalorder %s208, %s209
      %p220 = scmp.eq.s32.totalorder %s28, 0
      %p221 = por %p219, %p220
      %p222 = scmp.ne.s32.totalorder %s208, %s209
      %p223 = scmp.eq.s32.totalorder %s29, 3
      %p224 = por %p222, %p223
      %p226 = scmp.ne.s32.totalorder %s209, %s225
      %p227 = scmp.eq.s32.totalorder %s29, 0
      %p228 = por %p226, %p227
      %s229 = ssub.s32 %s31, %s38
      %p230 = scmp.eq.s32.totalorder %s229, 0
      %s232 = sadd.s32 %s231, 1
      %s233 = scalar_select %p230, %s231, %s232
      %p236 = pneg %p230
      %p237 = scmp.eq.s32.totalorder %s23, 3
      %p238 = por %p236, %p237
      %p239 = scmp.ne.s32.totalorder %s231, %s234
      %p240 = scmp.eq.s32.totalorder %s23, 0
      %p241 = por %p239, %p240
      %p242 = scmp.ne.s32.totalorder %s231, %s234
      %p243 = scmp.eq.s32.totalorder %s28, 3
      %p244 = por %p242, %p243
      %p245 = scmp.ne.s32.totalorder %s234, %s235
      %p246 = scmp.eq.s32.totalorder %s28, 0
      %p247 = por %p245, %p246
      %p248 = scmp.ne.s32.totalorder %s234, %s235
      %p249 = scmp.eq.s32.totalorder %s29, 3
      %p250 = por %p248, %p249
      %p252 = scmp.ne.s32.totalorder %s235, %s251
      %p253 = scmp.eq.s32.totalorder %s29, 0
      %p254 = por %p252, %p253
      %s256 = sadd.s32 %s255, 1
      %p259 = scmp.eq.s32.totalorder %s23, 3
      %p260 = scmp.ne.s32.totalorder %s255, %s257
      %p261 = scmp.eq.s32.totalorder %s23, 0
      %p262 = por %p260, %p261
      %p263 = scmp.ne.s32.totalorder %s255, %s257
      %p264 = scmp.eq.s32.totalorder %s28, 3
      %p265 = por %p263, %p264
      %p266 = scmp.ne.s32.totalorder %s257, %s258
      %p267 = scmp.eq.s32.totalorder %s28, 0
      %p268 = por %p266, %p267
      %p269 = scmp.ne.s32.totalorder %s257, %s258
      %p270 = scmp.eq.s32.totalorder %s29, 3
      %p271 = por %p269, %p270
      %p273 = scmp.ne.s32.totalorder %s258, %s272
      %p274 = scmp.eq.s32.totalorder %s29, 0
      %p275 = por %p273, %p274
      %s277 = sadd.s32 %s276, 1
      %p280 = scmp.eq.s32.totalorder %s23, 3
      %p281 = scmp.ne.s32.totalorder %s276, %s278
      %p282 = scmp.eq.s32.totalorder %s23, 0
      %p283 = por %p281, %p282
      %p284 = scmp.ne.s32.totalorder %s276, %s278
      %p285 = scmp.eq.s32.totalorder %s28, 3
      %p286 = por %p284, %p285
      %p287 = scmp.ne.s32.totalorder %s278, %s279
      %p288 = scmp.eq.s32.totalorder %s28, 0
      %p289 = por %p287, %p288
      %p290 = scmp.ne.s32.totalorder %s278, %s279
      %p291 = scmp.eq.s32.totalorder %s29, 3
      %p292 = por %p290, %p291
      %p294 = scmp.ne.s32.totalorder %s279, %s293
      %p295 = scmp.eq.s32.totalorder %s29, 0
      %p296 = por %p294, %p295
      %s298 = sadd.s32 %s297, 1
      %p301 = scmp.eq.s32.totalorder %s23, 3
      %p302 = scmp.ne.s32.totalorder %s297, %s299
      %p303 = scmp.eq.s32.totalorder %s23, 0
      %p304 = por %p302, %p303
      %p305 = scmp.ne.s32.totalorder %s297, %s299
      %p306 = scmp.eq.s32.totalorder %s28, 3
      %p307 = por %p305, %p306
      %p308 = scmp.ne.s32.totalorder %s299, %s300
      %p309 = scmp.eq.s32.totalorder %s28, 0
      %p310 = por %p308, %p309
      %p311 = scmp.ne.s32.totalorder %s299, %s300
      %p312 = scmp.eq.s32.totalorder %s29, 3
      %p313 = por %p311, %p312
      %p315 = scmp.ne.s32.totalorder %s300, %s314
      %p316 = scmp.eq.s32.totalorder %s29, 0
      %p317 = por %p315, %p316
      %s319 = sadd.s32 %s318, 1
      %p322 = scmp.eq.s32.totalorder %s23, 3
      %p323 = scmp.ne.s32.totalorder %s318, %s320
      %p324 = scmp.eq.s32.totalorder %s23, 0
      %p325 = por %p323, %p324
      %p326 = scmp.ne.s32.totalorder %s318, %s320
      %p327 = scmp.eq.s32.totalorder %s28, 3
      %p328 = por %p326, %p327
      %p329 = scmp.ne.s32.totalorder %s320, %s321
      %p330 = scmp.eq.s32.totalorder %s28, 0
      %p331 = por %p329, %p330
      %p332 = scmp.ne.s32.totalorder %s320, %s321
      %p333 = scmp.eq.s32.totalorder %s29, 3
      %p334 = por %p332, %p333
      %p336 = scmp.ne.s32.totalorder %s321, %s335
      %p337 = scmp.eq.s32.totalorder %s29, 0
      %p338 = por %p336, %p337
      %s340 = sadd.s32 %s339, 1
      %p343 = scmp.eq.s32.totalorder %s23, 3
      %p344 = scmp.ne.s32.totalorder %s339, %s341
      %p345 = scmp.eq.s32.totalorder %s23, 0
      %p346 = por %p344, %p345
      %p347 = scmp.ne.s32.totalorder %s339, %s341
      %p348 = scmp.eq.s32.totalorder %s28, 3
      %p349 = por %p347, %p348
      %p350 = scmp.ne.s32.totalorder %s341, %s342
      %p351 = scmp.eq.s32.totalorder %s28, 0
      %p352 = por %p350, %p351
      %p353 = scmp.ne.s32.totalorder %s341, %s342
      %p354 = scmp.eq.s32.totalorder %s29, 3
      %p355 = por %p353, %p354
      %p357 = scmp.ne.s32.totalorder %s342, %s356
      %p358 = scmp.eq.s32.totalorder %s29, 0
      %p359 = por %p357, %p358
      %s361 = sadd.s32 %s360, 1
      %p364 = scmp.eq.s32.totalorder %s23, 3
      %p365 = scmp.ne.s32.totalorder %s360, %s362
      %p366 = scmp.eq.s32.totalorder %s23, 0
      %p367 = por %p365, %p366
      %p368 = scmp.ne.s32.totalorder %s360, %s362
      %p369 = scmp.eq.s32.totalorder %s28, 3
      %p370 = por %p368, %p369
      %p371 = scmp.ne.s32.totalorder %s362, %s363
      %p372 = scmp.eq.s32.totalorder %s28, 0
      %p373 = por %p371, %p372
      %p374 = scmp.ne.s32.totalorder %s362, %s363
      %p375 = scmp.eq.s32.totalorder %s29, 3
      %p376 = por %p374, %p375
      %p378 = scmp.ne.s32.totalorder %s363, %s377
      %p379 = scmp.eq.s32.totalorder %s29, 0
      %p380 = por %p378, %p379
      %s381 = ssub.s32 %s30, %s42
      %s382 = ssub.s32 %s31, %s38
      %s383 = sor.u32 %s381, %s382
      %p384 = scmp.eq.s32.totalorder %s383, 0
      %s386 = sadd.s32 %s385, 1
      %s387 = scalar_select %p384, %s385, %s386
      %p390 = pneg %p384
      %p391 = scmp.eq.s32.totalorder %s23, 3
      %p392 = por %p390, %p391
      %p393 = scmp.ne.s32.totalorder %s385, %s388
      %p394 = scmp.eq.s32.totalorder %s23, 0
      %p395 = por %p393, %p394
      %p396 = scmp.ne.s32.totalorder %s385, %s388
      %p397 = scmp.eq.s32.totalorder %s28, 3
      %p398 = por %p396, %p397
      %p399 = scmp.ne.s32.totalorder %s388, %s389
      %p400 = scmp.eq.s32.totalorder %s28, 0
      %p401 = por %p399, %p400
      %p402 = scmp.ne.s32.totalorder %s388, %s389
      %p403 = scmp.eq.s32.totalorder %s29, 3
      %p404 = por %p402, %p403
      %p406 = scmp.ne.s32.totalorder %s389, %s405
      %p407 = scmp.eq.s32.totalorder %s29, 0
      %p408 = por %p406, %p407
      %p409 = scmp.le.s32.totalorder 1, %s23
      %p410 = scmp.lt.s32.totalorder %s23, 5
      %p411 = pnand %p409, %p410
      %p412 = pneg %p411
      // Predicated region
      $region9: #{tpu_custom_call.1} parent=5 // pred_check
        _
      $region10: #{tpu_custom_call.1} parent=5 // pred_check_branch
        %414 = sbr.rel (%p411) target = $region12
      $region11: #{tpu_custom_call.1} parent=5 // pred_region
        %s415 = ssub.s32 %s23, 1
        // Predicated region
        $region13: #{tpu_custom_call.1} parent=11 // pred_check
          %p416 = pneg %p117
        $region14: #{tpu_custom_call.1} parent=11 // pred_check_branch
          %418 = sbr.rel (%p416) target = $region16
        $region15: #{tpu_custom_call.1} parent=11 // pred_region
          %p419 = scmp.lt.s32.totalorder %s32, 1
          %s420 = scalar_select %p419, %s32, 1
          %s421 = smul.addr %s420, 2
          %s422 = smul.addr %s421, 8
          %s423 = scalar_lea.vmem %s2, %s422
        $region16: #{tpu_custom_call.1} parent=11 // pred_fallthru
          _
        // Predicated region
        $region17: #{tpu_custom_call.1} parent=11 // pred_check
          %p424 = pneg %p143
        $region18: #{tpu_custom_call.1} parent=11 // pred_check_branch
          %426 = sbr.rel (%p424) target = $region20
        $region19: #{tpu_custom_call.1} parent=11 // pred_region
          %p427 = scmp.lt.s32.totalorder %s32, 1
          %s428 = scalar_select %p427, %s32, 1
          %s429 = smul.addr %s428, 2
          %s430 = smul.addr %s429, 8
          %s431 = scalar_lea.vmem %s3, %s430
        $region20: #{tpu_custom_call.1} parent=11 // pred_fallthru
          _
        // Predicated region
        $region21: #{tpu_custom_call.1} parent=11 // pred_check
          %p432 = pneg %p169
        $region22: #{tpu_custom_call.1} parent=11 // pred_check_branch
          %434 = sbr.rel (%p432) target = $region24
        $region23: #{tpu_custom_call.1} parent=11 // pred_region
          %p435 = scmp.lt.s32.totalorder %s32, 1
          %s436 = scalar_select %p435, %s32, 1
          %s437 = smul.addr %s436, 4
          %s438 = scalar_lea.vmem %s4, %s437
        $region24: #{tpu_custom_call.1} parent=11 // pred_fallthru
          _
        // Predicated region
        $region25: #{tpu_custom_call.1} parent=11 // pred_check
          %p439 = pneg %p195
        $region26: #{tpu_custom_call.1} parent=11 // pred_check_branch
          %441 = sbr.rel (%p439) target = $region28
        $region27: #{tpu_custom_call.1} parent=11 // pred_region
          %p442 = scmp.lt.s32.totalorder %s32, 1
          %s443 = scalar_select %p442, %s32, 1
          %s444 = smul.addr %s443, 4
          %s445 = scalar_lea.vmem %s5, %s444
        $region28: #{tpu_custom_call.1} parent=11 // pred_fallthru
          _
        // Predicated region
        $region29: #{tpu_custom_call.1} parent=11 // pred_check
          %p446 = pneg %p268
        $region30: #{tpu_custom_call.1} parent=11 // pred_check_branch
          %448 = sbr.rel (%p446) target = $region32
        $region31: #{tpu_custom_call.1} parent=11 // pred_region
          _
        $region32: #{tpu_custom_call.1} parent=11 // pred_fallthru
          _
        // Predicated region
        $region33: #{tpu_custom_call.1} parent=11 // pred_check
          %p449 = pneg %p289
        $region34: #{tpu_custom_call.1} parent=11 // pred_check_branch
          %451 = sbr.rel (%p449) target = $region36
        $region35: #{tpu_custom_call.1} parent=11 // pred_region
          _
        $region36: #{tpu_custom_call.1} parent=11 // pred_fallthru
          _
        // Predicated region
        $region37: #{tpu_custom_call.1} parent=11 // pred_check
          %p452 = pneg %p310
        $region38: #{tpu_custom_call.1} parent=11 // pred_check_branch
          %454 = sbr.rel (%p452) target = $region40
        $region39: #{tpu_custom_call.1} parent=11 // pred_region
          _
        $region40: #{tpu_custom_call.1} parent=11 // pred_fallthru
          _
        // Predicated region
        $region41: #{tpu_custom_call.1} parent=11 // pred_check
          %p455 = pneg %p331
        $region42: #{tpu_custom_call.1} parent=11 // pred_check_branch
          %457 = sbr.rel (%p455) target = $region44
        $region43: #{tpu_custom_call.1} parent=11 // pred_region
          _
        $region44: #{tpu_custom_call.1} parent=11 // pred_fallthru
          _
        // Predicated region
        $region45: #{tpu_custom_call.1} parent=11 // pred_check
          %p458 = pneg %p352
        $region46: #{tpu_custom_call.1} parent=11 // pred_check_branch
          %460 = sbr.rel (%p458) target = $region48
        $region47: #{tpu_custom_call.1} parent=11 // pred_region
          _
        $region48: #{tpu_custom_call.1} parent=11 // pred_fallthru
          _
        // Predicated region
        $region49: #{tpu_custom_call.1} parent=11 // pred_check
          %p461 = pneg %p373
        $region50: #{tpu_custom_call.1} parent=11 // pred_check_branch
          %463 = sbr.rel (%p461) target = $region52
        $region51: #{tpu_custom_call.1} parent=11 // pred_region
          _
        $region52: #{tpu_custom_call.1} parent=11 // pred_fallthru
          _
      $region12: #{tpu_custom_call.1} parent=5 // pred_fallthru
        _
      %p464 = scmp.lt.s32.totalorder %s23, 4
      // Predicated region
      $region53: #{tpu_custom_call.1} parent=5 // pred_check
        %p465 = pneg %p464
      $region54: #{tpu_custom_call.1} parent=5 // pred_check_branch
        %467 = sbr.rel (%p465) target = $region56
      $region55: #{tpu_custom_call.1} parent=5 // pred_region
        // Predicated region
        $region57: #{tpu_custom_call.1} parent=55 // pred_check
          %p468 = pneg %p57
        $region58: #{tpu_custom_call.1} parent=55 // pred_check_branch
          %470 = sbr.rel (%p468) target = $region60
        $region59: #{tpu_custom_call.1} parent=55 // pred_region
          %s471 = smul.u32 16, %s31
          %s472 = ssub.s32 42, %s471
          %p473 = scmp.lt.s32.totalorder %s472, 16
          %s474 = scalar_select %p473, %s472, 16
          %s475 = smul.u32 128, %s474
          %p476 = scmp.lt.s32.totalorder %s30, 1
          %s477 = scalar_select %p476, %s30, 1
          %p478 = scmp.lt.s32.totalorder %s471, 41
          %s479 = scalar_select %p478, %s471, 41
          %s480 = smul.addr %s477, 42
          %s481 = sadd.s32 %s479, %s480
          %s482 = smul.addr %s481, 8
          %s483 = scalar_lea.vmem %s0, %s482
          %s484 = smul.u32 16, %s31
          %s485 = ssub.s32 42, %s484
          %p486 = scmp.lt.s32.totalorder %s485, 16
          %s487 = scalar_select %p486, %s485, 16
          %s488 = smul.u32 128, %s487
        $region60: #{tpu_custom_call.1} parent=55 // pred_fallthru
          _
        // Predicated region
        $region61: #{tpu_custom_call.1} parent=55 // pred_check
          %p489 = pneg %p85
        $region62: #{tpu_custom_call.1} parent=55 // pred_check_branch
          %491 = sbr.rel (%p489) target = $region64
        $region63: #{tpu_custom_call.1} parent=55 // pred_region
          %s492 = smul.u32 16, %s31
          %s493 = ssub.s32 42, %s492
          %p494 = scmp.lt.s32.totalorder %s493, 16
          %s495 = scalar_select %p494, %s493, 16
          %s496 = smul.u32 128, %s495
          %p497 = scmp.lt.s32.totalorder %s30, 1
          %s498 = scalar_select %p497, %s30, 1
          %p499 = scmp.lt.s32.totalorder %s492, 41
          %s500 = scalar_select %p499, %s492, 41
          %s501 = smul.addr %s498, 42
          %s502 = sadd.s32 %s500, %s501
          %s503 = smul.addr %s502, 8
          %s504 = scalar_lea.vmem %s1, %s503
          %s505 = smul.u32 16, %s31
          %s506 = ssub.s32 42, %s505
          %p507 = scmp.lt.s32.totalorder %s506, 16
          %s508 = scalar_select %p507, %s506, 16
          %s509 = smul.u32 128, %s508
        $region64: #{tpu_custom_call.1} parent=55 // pred_fallthru
          _
        // Predicated region
        $region65: #{tpu_custom_call.1} parent=55 // pred_check
          %p510 = pneg %p215
        $region66: #{tpu_custom_call.1} parent=55 // pred_check_branch
          %512 = sbr.rel (%p510) target = $region68
        $region67: #{tpu_custom_call.1} parent=55 // pred_region
          %p513 = scmp.lt.s32.totalorder %s31, 1
          %s514 = scalar_select %p513, %s31, 1
          %s515 = smul.addr %s514, 8
          %s516 = scalar_lea.vmem %s6, %s515
        $region68: #{tpu_custom_call.1} parent=55 // pred_fallthru
          _
        // Predicated region
        $region69: #{tpu_custom_call.1} parent=55 // pred_check
          %p517 = pneg %p241
        $region70: #{tpu_custom_call.1} parent=55 // pred_check_branch
          %519 = sbr.rel (%p517) target = $region72
        $region71: #{tpu_custom_call.1} parent=55 // pred_region
          %p520 = scmp.lt.s32.totalorder %s31, 1
          %s521 = scalar_select %p520, %s31, 1
          %s522 = smul.addr %s521, 8
          %s523 = scalar_lea.vmem %s7, %s522
        $region72: #{tpu_custom_call.1} parent=55 // pred_fallthru
          _
      $region56: #{tpu_custom_call.1} parent=5 // pred_fallthru
        _
      %p524 = scmp.le.s32.totalorder 1, %s23
      %p525 = scmp.lt.s32.totalorder %s23, 5
      %p526 = pnand %p524, %p525
      %p527 = pneg %p526
      // Predicated region
      $region73: #{tpu_custom_call.1} parent=5 // pred_check
        _
      $region74: #{tpu_custom_call.1} parent=5 // pred_check_branch
        %529 = sbr.rel (%p526) target = $region76
      $region75: #{tpu_custom_call.1} parent=5 // pred_region
        %s530 = ssub.s32 %s23, 1
        %s531 = smul.u32 16, %s33
        %s532 = ssub.s32 42, %s531
        %p533 = scmp.lt.s32.totalorder %s532, 16
        %s534 = scalar_select %p533, %s532, 16
        %s535 = smul.u32 128, %s534
        %p536 = scmp.lt.s32.totalorder %s32, 1
        %s537 = scalar_select %p536, %s32, 1
        %p538 = scmp.lt.s32.totalorder %s531, 41
        %s539 = scalar_select %p538, %s531, 41
        %s540 = smul.addr %s537, 42
        %s541 = sadd.s32 %s539, %s540
        %s542 = smul.addr %s541, 8
        %s543 = scalar_lea.vmem %s0, %s542
        %p544 = pneg %p63
        %p545 = pneg %p60
        %s546 = smul.u32 16, %s33
        %s547 = ssub.s32 42, %s546
        %p548 = scmp.lt.s32.totalorder %s547, 16
        %s549 = scalar_select %p548, %s547, 16
        %s550 = smul.u32 128, %s549
        %p551 = scmp.lt.s32.totalorder %s32, 1
        %s552 = scalar_select %p551, %s32, 1
        %p553 = scmp.lt.s32.totalorder %s546, 41
        %s554 = scalar_select %p553, %s546, 41
        %s555 = smul.addr %s552, 42
        %s556 = sadd.s32 %s554, %s555
        %s557 = smul.addr %s556, 8
        %s558 = scalar_lea.vmem %s1, %s557
        %p559 = pneg %p91
        %p560 = pneg %p88
        %p561 = scmp.lt.s32.totalorder %s32, 1
        %s562 = scalar_select %p561, %s32, 1
        %s563 = smul.addr %s562, 2
        %s564 = smul.addr %s563, 8
        %s565 = scalar_lea.vmem %s2, %s564
        %p566 = pneg %p117
        %p567 = pneg %p114
        %p568 = scmp.lt.s32.totalorder %s32, 1
        %s569 = scalar_select %p568, %s32, 1
        %s570 = smul.addr %s569, 2
        %s571 = smul.addr %s570, 8
        %s572 = scalar_lea.vmem %s3, %s571
        %p573 = pneg %p143
        %p574 = pneg %p140
        %p575 = scmp.lt.s32.totalorder %s32, 1
        %s576 = scalar_select %p575, %s32, 1
        %s577 = smul.addr %s576, 4
        %s578 = scalar_lea.vmem %s4, %s577
        %p579 = pneg %p169
        %p580 = pneg %p166
        %p581 = scmp.lt.s32.totalorder %s32, 1
        %s582 = scalar_select %p581, %s32, 1
        %s583 = smul.addr %s582, 4
        %s584 = scalar_lea.vmem %s5, %s583
        %p585 = pneg %p195
        %p586 = pneg %p192
        %p587 = scmp.lt.s32.totalorder %s33, 1
        %s588 = scalar_select %p587, %s33, 1
        %s589 = smul.addr %s588, 8
        %s590 = scalar_lea.vmem %s6, %s589
        %p591 = pneg %p221
        %p592 = pneg %p218
        %p593 = scmp.lt.s32.totalorder %s33, 1
        %s594 = scalar_select %p593, %s33, 1
        %s595 = smul.addr %s594, 8
        %s596 = scalar_lea.vmem %s7, %s595
        %p597 = pneg %p247
        %p598 = pneg %p244
        %p599 = pneg %p268
        %p600 = pneg %p265
        %p601 = pneg %p289
        %p602 = pneg %p286
        %p603 = pneg %p310
        %p604 = pneg %p307
        %p605 = pneg %p331
        %p606 = pneg %p328
        %p607 = pneg %p352
        %p608 = pneg %p349
        %p609 = pneg %p373
        %p610 = pneg %p370
        %p611 = pneg %p401
        %p612 = pneg %p398
        %s613 = sand.u32 %s388, 1
        %s614 = scalar_lea.sflag [#allocation3], %s613
        %s615 = sand.u32 %s388, 1
        %s616 = smul.addr %s615, 16
        %s617 = scalar_lea.vmem [#allocation2], %s616
        %s618 = smul.u32 16, %s33
        %s619 = ssub.s32 42, %s618
        %p620 = scmp.lt.s32.totalorder %s619, 16
        %s621 = scalar_select %p620, %s619, 16
        %s622 = smul.u32 128, %s621
        %p623 = scmp.lt.s32.totalorder %s32, 1
        %s624 = scalar_select %p623, %s32, 1
        %p625 = scmp.lt.s32.totalorder %s618, 41
        %s626 = scalar_select %p625, %s618, 41
        %s627 = smul.addr %s624, 42
        %s628 = sadd.s32 %s626, %s627
        %s629 = smul.addr %s628, 8
        %s630 = scalar_lea.vmem %s0, %s629
        %s631 = smul.u32 16, %s33
        %s632 = ssub.s32 42, %s631
        %p633 = scmp.lt.s32.totalorder %s632, 16
        %s634 = scalar_select %p633, %s632, 16
        %s635 = smul.u32 128, %s634
        %s636 = smul.u32 16, %s33
        %s637 = ssub.s32 42, %s636
        %p638 = scmp.lt.s32.totalorder %s637, 16
        %s639 = scalar_select %p638, %s637, 16
        %s640 = smul.u32 128, %s639
        %p641 = scmp.lt.s32.totalorder %s32, 1
        %s642 = scalar_select %p641, %s32, 1
        %p643 = scmp.lt.s32.totalorder %s636, 41
        %s644 = scalar_select %p643, %s636, 41
        %s645 = smul.addr %s642, 42
        %s646 = sadd.s32 %s644, %s645
        %s647 = smul.addr %s646, 8
        %s648 = scalar_lea.vmem %s1, %s647
        %s649 = smul.u32 16, %s33
        %s650 = ssub.s32 42, %s649
        %p651 = scmp.lt.s32.totalorder %s650, 16
        %s652 = scalar_select %p651, %s650, 16
        %s653 = smul.u32 128, %s652
        %p654 = scmp.lt.s32.totalorder %s32, 1
        %s655 = scalar_select %p654, %s32, 1
        %s656 = smul.addr %s655, 2
        %s657 = smul.addr %s656, 8
        %s658 = scalar_lea.vmem %s2, %s657
        %p659 = scmp.lt.s32.totalorder %s32, 1
        %s660 = scalar_select %p659, %s32, 1
        %s661 = smul.addr %s660, 2
        %s662 = smul.addr %s661, 8
        %s663 = scalar_lea.vmem %s3, %s662
        %p664 = scmp.lt.s32.totalorder %s32, 1
        %s665 = scalar_select %p664, %s32, 1
        %s666 = smul.addr %s665, 4
        %s667 = scalar_lea.vmem %s4, %s666
        %p668 = scmp.lt.s32.totalorder %s32, 1
        %s669 = scalar_select %p668, %s32, 1
        %s670 = smul.addr %s669, 4
        %s671 = scalar_lea.vmem %s5, %s670
        %p672 = scmp.lt.s32.totalorder %s33, 1
        %s673 = scalar_select %p672, %s33, 1
        %s674 = smul.addr %s673, 8
        %s675 = scalar_lea.vmem %s6, %s674
        %p676 = scmp.lt.s32.totalorder %s33, 1
        %s677 = scalar_select %p676, %s33, 1
        %s678 = smul.addr %s677, 8
        %s679 = scalar_lea.vmem %s7, %s678
        %v680 = vld [vmem:[%s630] sm:$0xff]
        %v681 = vld [vmem:[%s630 + $0x8] sm:$0xff]
        %v682 = vld [vmem:[%s630 + $0x10] sm:$0xff]
        %v683 = vld [vmem:[%s630 + $0x18] sm:$0xff]
        %v684 = vld [vmem:[%s630 + $0x20] sm:$0xff]
        %v685 = vld [vmem:[%s630 + $0x28] sm:$0xff]
        %v686 = vld [vmem:[%s630 + $0x30] sm:$0xff]
        %v687 = vld [vmem:[%s630 + $0x38] sm:$0xff]
        %v688 = vld [vmem:[%s630 + $0x40] sm:$0xff]
        %v689 = vld [vmem:[%s630 + $0x48] sm:$0xff]
        %v690 = vld [vmem:[%s630 + $0x50] sm:$0xff]
        %v691 = vld [vmem:[%s630 + $0x58] sm:$0xff]
        %v692 = vld [vmem:[%s630 + $0x60] sm:$0xff]
        %v693 = vld [vmem:[%s630 + $0x68] sm:$0xff]
        %v694 = vld [vmem:[%s630 + $0x70] sm:$0xff]
        %v695 = vld [vmem:[%s630 + $0x78] sm:$0xff]
        %v696 = vld [vmem:[%s648] sm:$0xff]
        %v697 = vld [vmem:[%s648 + $0x8] sm:$0xff]
        %v698 = vld [vmem:[%s648 + $0x10] sm:$0xff]
        %v699 = vld [vmem:[%s648 + $0x18] sm:$0xff]
        %v700 = vld [vmem:[%s648 + $0x20] sm:$0xff]
        %v701 = vld [vmem:[%s648 + $0x28] sm:$0xff]
        %v702 = vld [vmem:[%s648 + $0x30] sm:$0xff]
        %v703 = vld [vmem:[%s648 + $0x38] sm:$0xff]
        %v704 = vld [vmem:[%s648 + $0x40] sm:$0xff]
        %v705 = vld [vmem:[%s648 + $0x48] sm:$0xff]
        %v706 = vld [vmem:[%s648 + $0x50] sm:$0xff]
        %v707 = vld [vmem:[%s648 + $0x58] sm:$0xff]
        %v708 = vld [vmem:[%s648 + $0x60] sm:$0xff]
        %v709 = vld [vmem:[%s648 + $0x68] sm:$0xff]
        %v710 = vld [vmem:[%s648 + $0x70] sm:$0xff]
        %v711 = vld [vmem:[%s648 + $0x78] sm:$0xff]
        %v712 = vadd.f32 %v680, %v696
        %v713 = vadd.f32 %v681, %v697
        %v714 = vadd.f32 %v682, %v698
        %v715 = vadd.f32 %v683, %v699
        %v716 = vadd.f32 %v684, %v700
        %v717 = vadd.f32 %v685, %v701
        %v718 = vadd.f32 %v686, %v702
        %v719 = vadd.f32 %v687, %v703
        %v720 = vadd.f32 %v688, %v704
        %v721 = vadd.f32 %v689, %v705
        %v722 = vadd.f32 %v690, %v706
        %v723 = vadd.f32 %v691, %v707
        %v724 = vadd.f32 %v692, %v708
        %v725 = vadd.f32 %v693, %v709
        %v726 = vadd.f32 %v694, %v710
        %v727 = vadd.f32 %v695, %v711
        %v728 = vld [vmem:[%s658] sm:$0xff]
        %v729 = vld [vmem:[%s658 + $0x8] sm:$0xff]
        %v730 = vld [vmem:[%s663] sm:$0xff]
        %v731 = vld [vmem:[%s663 + $0x8] sm:$0xff]
        %v732 = vadd.f32 %v728, %v730
        %v733 = vadd.f32 %v729, %v731
        %v734 = vld [vmem:[%s675] sm:$0xff]
        %vm735 = vcmask 64512
        %v737 = vsel %vm735, %v734, 0
        %739 = vmatprep.subr.mxu0 %v733
        %740 = vmatpush1.msra.mxu0 %v732
        %741 = vmatprep.subr.mxu0 0.0
        %742 = vmatpush1.msra.mxu0 0.0
        %743 = vmatprep.subr.mxu0 0.0
        %744 = vmatpush1.msra.mxu0 0.0
        %745 = vmatprep.subr.mxu0 0.0
        %746 = vmatpush1.msra.mxu0 0.0
        %747 = vmatprep.subr.mxu0 0.0
        %748 = vmatpush1.msra.mxu0 0.0
        %749 = vmatprep.subr.mxu0 0.0
        %750 = vmatpush1.msra.mxu0 0.0
        %751 = vmatprep.subr.mxu0 0.0
        %752 = vmatpush1.msra.mxu0 0.0
        %753 = vmatprep.subr.mxu0 0.0
        %754 = vmatpush1.msra.mxu0 0.0
        %755 = vmatprep.subr.mxu0 0.0
        %756 = vmatpush1.msra.mxu0 0.0
        %757 = vmatprep.subr.mxu0 0.0
        %758 = vmatpush1.msra.mxu0 0.0
        %759 = vmatprep.subr.mxu0 0.0
        %760 = vmatpush1.msra.mxu0 0.0
        %761 = vmatprep.subr.mxu0 0.0
        %762 = vmatpush1.msra.mxu0 0.0
        %763 = vmatprep.subr.mxu0 0.0
        %764 = vmatpush1.msra.mxu0 0.0
        %765 = vmatprep.subr.mxu0 0.0
        %766 = vmatpush1.msra.mxu0 0.0
        %767 = vmatprep.subr.mxu0 0.0
        %768 = vmatpush1.msra.mxu0 0.0
        %769 = vmatprep.subr.mxu0 0.0
        %770 = vmatpush1.msra.mxu0 0.0
        %771 = vmatprep.subr.mxu0 0.0
        %772 = vmatpush1.msra.mxu0 0.0
        %773 = vmatprep.subr.mxu0 0.0
        %774 = vmatpush1.msra.mxu0 0.0
        %775 = vmatprep.subr.mxu0 0.0
        %776 = vmatpush1.msra.mxu0 0.0
        %777 = vmatprep.subr.mxu0 0.0
        %778 = vmatpush1.msra.mxu0 0.0
        %779 = vmatprep.subr.mxu0 0.0
        %780 = vmatpush1.msra.mxu0 0.0
        %781 = vmatprep.subr.mxu0 0.0
        %782 = vmatpush1.msra.mxu0 0.0
        %783 = vmatprep.subr.mxu0 0.0
        %784 = vmatpush1.msra.mxu0 0.0
        %785 = vmatprep.subr.mxu0 0.0
        %786 = vmatpush1.msra.mxu0 0.0
        %787 = vmatprep.subr.mxu0 0.0
        %788 = vmatpush1.msra.mxu0 0.0
        %789 = vmatprep.subr.mxu0 0.0
        %790 = vmatpush1.msra.mxu0 0.0
        %791 = vmatprep.subr.mxu0 0.0
        %792 = vmatpush1.msra.mxu0 0.0
        %793 = vmatprep.subr.mxu0 0.0
        %794 = vmatpush1.msra.mxu0 0.0
        %795 = vmatprep.subr.mxu0 0.0
        %796 = vmatpush1.msra.mxu0 0.0
        %797 = vmatprep.subr.mxu0 0.0
        %798 = vmatpush1.msra.mxu0 0.0
        %799 = vmatprep.subr.mxu0 0.0
        %800 = vmatpush1.msra.mxu0 0.0
        %801 = vmatprep.subr.mxu0 0.0
        %802 = vmatpush1.msra.mxu0 0.0
        %803 = vmatprep.mubr.f32.mxu0 0.0
        %804 = vmatmul.mubr.f32.gmra.mrb[0].mxu0 %v737
        %v805 = vpop.f32.mrb[0].mxu0
        %v806 = vadd.f32 0.0, %v805
        %v807 = vpop.f32.mrb[0].mxu0
        %v808 = vadd.f32 0.0, %v807
        %809 = vdwg.mxu0
        %811 = vrot.lane.b32.xlu0 %v806, 96
        %v812 = vpop.permute.xlu0 %811
        %814 = vrot.lane.b32.xlu0 %v806, 64
        %v815 = vpop.permute.xlu0 %814
        %817 = vrot.lane.b32.xlu0 %v806, 32
        %v818 = vpop.permute.xlu0 %817
        %821 = vrot.lane.b32.xlu0 %v808, 96
        %v822 = vpop.permute.xlu0 %821
        %824 = vrot.lane.b32.xlu0 %v808, 64
        %v825 = vpop.permute.xlu0 %824
        %827 = vrot.lane.b32.xlu0 %v808, 32
        %v828 = vpop.permute.xlu0 %827
        %v830 = vcombine.low %v806, %v815
        %v831 = vcombine.high %v806, %v815
        %v833 = vunpack.c.l.s4 1983009808
        %v834 = vunpack.c.0.s8 %v833
        %v835 = vlaneseq
        %v836 = vshrl.u32 %v835, 7
        %v837 = vsub.s32 %v834, %v836
        %v838 = vrot.slane %v830, %v837
        %v840 = vunpack.c.l.s4 1983009808
        %v841 = vunpack.c.0.s8 %v840
        %v842 = vlaneseq
        %v843 = vshrl.u32 %v842, 7
        %v844 = vsub.s32 %v841, %v843
        %v845 = vrot.slane %v831, %v844
        %v846 = vcombine.low %v812, %v818
        %v847 = vcombine.high %v812, %v818
        %v849 = vunpack.c.l.s4 1983009808
        %v850 = vunpack.c.0.s8 %v849
        %v851 = vlaneseq
        %v852 = vshrl.u32 %v851, 7
        %v853 = vsub.s32 %v850, %v852
        %v854 = vrot.slane %v846, %v853
        %v856 = vunpack.c.l.s4 1983009808
        %v857 = vunpack.c.0.s8 %v856
        %v858 = vlaneseq
        %v859 = vshrl.u32 %v858, 7
        %v860 = vsub.s32 %v857, %v859
        %v861 = vrot.slane %v847, %v860
        %v862 = vcombine.low %v808, %v825
        %v863 = vcombine.high %v808, %v825
        %v865 = vunpack.c.l.s4 1983009808
        %v866 = vunpack.c.0.s8 %v865
        %v867 = vlaneseq
        %v868 = vshrl.u32 %v867, 7
        %v869 = vsub.s32 %v866, %v868
        %v870 = vrot.slane %v862, %v869
        %v872 = vunpack.c.l.s4 1983009808
        %v873 = vunpack.c.0.s8 %v872
        %v874 = vlaneseq
        %v875 = vshrl.u32 %v874, 7
        %v876 = vsub.s32 %v873, %v875
        %v877 = vrot.slane %v863, %v876
        %v878 = vcombine.low %v822, %v828
        %v879 = vcombine.high %v822, %v828
        %v881 = vunpack.c.l.s4 1983009808
        %v882 = vunpack.c.0.s8 %v881
        %v883 = vlaneseq
        %v884 = vshrl.u32 %v883, 7
        %v885 = vsub.s32 %v882, %v884
        %v886 = vrot.slane %v878, %v885
        %v888 = vunpack.c.l.s4 1983009808
        %v889 = vunpack.c.0.s8 %v888
        %v890 = vlaneseq
        %v891 = vshrl.u32 %v890, 7
        %v892 = vsub.s32 %v889, %v891
        %v893 = vrot.slane %v879, %v892
        %v894 = vcombine.low %v838, %v854
        %v895 = vcombine.high %v838, %v854
        %v897 = vunpack.c.l.s4 1934713408
        %v898 = vunpack.c.0.s8 %v897
        %v899 = vlaneseq
        %v900 = vshrl.u32 %v899, 7
        %v901 = vsub.s32 %v898, %v900
        %v902 = vrot.slane %v894, %v901
        %v904 = vunpack.c.l.s4 1934713408
        %v905 = vunpack.c.0.s8 %v904
        %v906 = vlaneseq
        %v907 = vshrl.u32 %v906, 7
        %v908 = vsub.s32 %v905, %v907
        %v909 = vrot.slane %v895, %v908
        %v910 = vcombine.low %v845, %v861
        %v911 = vcombine.high %v845, %v861
        %v913 = vunpack.c.l.s4 1934713408
        %v914 = vunpack.c.0.s8 %v913
        %v915 = vlaneseq
        %v916 = vshrl.u32 %v915, 7
        %v917 = vsub.s32 %v914, %v916
        %v918 = vrot.slane %v910, %v917
        %v920 = vunpack.c.l.s4 1934713408
        %v921 = vunpack.c.0.s8 %v920
        %v922 = vlaneseq
        %v923 = vshrl.u32 %v922, 7
        %v924 = vsub.s32 %v921, %v923
        %v925 = vrot.slane %v911, %v924
        %v926 = vcombine.low %v870, %v886
        %v927 = vcombine.high %v870, %v886
        %v929 = vunpack.c.l.s4 1934713408
        %v930 = vunpack.c.0.s8 %v929
        %v931 = vlaneseq
        %v932 = vshrl.u32 %v931, 7
        %v933 = vsub.s32 %v930, %v932
        %v934 = vrot.slane %v926, %v933
        %v936 = vunpack.c.l.s4 1934713408
        %v937 = vunpack.c.0.s8 %v936
        %v938 = vlaneseq
        %v939 = vshrl.u32 %v938, 7
        %v940 = vsub.s32 %v937, %v939
        %v941 = vrot.slane %v927, %v940
        %v942 = vcombine.low %v877, %v893
        %v943 = vcombine.high %v877, %v893
        %v945 = vunpack.c.l.s4 1934713408
        %v946 = vunpack.c.0.s8 %v945
        %v947 = vlaneseq
        %v948 = vshrl.u32 %v947, 7
        %v949 = vsub.s32 %v946, %v948
        %v950 = vrot.slane %v942, %v949
        %v952 = vunpack.c.l.s4 1934713408
        %v953 = vunpack.c.0.s8 %v952
        %v954 = vlaneseq
        %v955 = vshrl.u32 %v954, 7
        %v956 = vsub.s32 %v953, %v955
        %v957 = vrot.slane %v943, %v956
        %v958 = vcombine.low %v902, %v934
        %v959 = vcombine.high %v902, %v934
        %v960 = vcombine.low %v909, %v941
        %v961 = vcombine.high %v909, %v941
        %v962 = vcombine.low %v918, %v950
        %v963 = vcombine.high %v918, %v950
        %v964 = vcombine.low %v925, %v957
        %v965 = vcombine.high %v925, %v957
        %v966 = vld [vmem:[%s8] sm:$0xff]
        %v967 = vld [vmem:[%s8 + $0x8] sm:$0xff]
        %v968 = vld [vmem:[%s8 + $0x10] sm:$0xff]
        %v969 = vld [vmem:[%s8 + $0x18] sm:$0xff]
        %v970 = vld [vmem:[%s8 + $0x20] sm:$0xff]
        %v971 = vld [vmem:[%s8 + $0x28] sm:$0xff]
        %v972 = vld [vmem:[%s8 + $0x30] sm:$0xff]
        %v973 = vld [vmem:[%s8 + $0x38] sm:$0xff]
        %v974 = vld [vmem:[%s8 + $0x40] sm:$0xff]
        %v975 = vld [vmem:[%s8 + $0x48] sm:$0xff]
        %v976 = vld [vmem:[%s8 + $0x50] sm:$0xff]
        %v977 = vld [vmem:[%s8 + $0x58] sm:$0xff]
        %v978 = vld [vmem:[%s8 + $0x60] sm:$0xff]
        %v979 = vld [vmem:[%s8 + $0x68] sm:$0xff]
        %v980 = vld [vmem:[%s8 + $0x70] sm:$0xff]
        %v981 = vld [vmem:[%s8 + $0x78] sm:$0xff]
        %v983 = vsel %vm735, %v966, 0
        %v986 = vsel %vm735, %v967, 0
        %988 = vmatprep.subr.mxu0 0.0
        %989 = vmatpush1.msra.mxu0 %v958
        %990 = vmatprep.subr.mxu0 0.0
        %991 = vmatpush1.msra.mxu0 0.0
        %992 = vmatprep.subr.mxu0 0.0
        %993 = vmatpush1.msra.mxu0 0.0
        %994 = vmatprep.subr.mxu0 0.0
        %995 = vmatpush1.msra.mxu0 0.0
        %996 = vmatprep.subr.mxu0 0.0
        %997 = vmatpush1.msra.mxu0 0.0
        %998 = vmatprep.subr.mxu0 0.0
        %999 = vmatpush1.msra.mxu0 0.0
        %1000 = vmatprep.subr.mxu0 0.0
        %1001 = vmatpush1.msra.mxu0 0.0
        %1002 = vmatprep.subr.mxu0 0.0
        %1003 = vmatpush1.msra.mxu0 0.0
        %1004 = vmatprep.subr.mxu0 0.0
        %1005 = vmatpush1.msra.mxu0 0.0
        %1006 = vmatprep.subr.mxu0 0.0
        %1007 = vmatpush1.msra.mxu0 0.0
        %1008 = vmatprep.subr.mxu0 0.0
        %1009 = vmatpush1.msra.mxu0 0.0
        %1010 = vmatprep.subr.mxu0 0.0
        %1011 = vmatpush1.msra.mxu0 0.0
        %1012 = vmatprep.subr.mxu0 0.0
        %1013 = vmatpush1.msra.mxu0 0.0
        %1014 = vmatprep.subr.mxu0 0.0
        %1015 = vmatpush1.msra.mxu0 0.0
        %1016 = vmatprep.subr.mxu0 0.0
        %1017 = vmatpush1.msra.mxu0 0.0
        %1018 = vmatprep.subr.mxu0 0.0
        %1019 = vmatpush1.msra.mxu0 0.0
        %1020 = vmatprep.subr.mxu0 0.0
        %1021 = vmatpush1.msra.mxu0 0.0
        %1022 = vmatprep.subr.mxu0 0.0
        %1023 = vmatpush1.msra.mxu0 0.0
        %1024 = vmatprep.subr.mxu0 0.0
        %1025 = vmatpush1.msra.mxu0 0.0
        %1026 = vmatprep.subr.mxu0 0.0
        %1027 = vmatpush1.msra.mxu0 0.0
        %1028 = vmatprep.subr.mxu0 0.0
        %1029 = vmatpush1.msra.mxu0 0.0
        %1030 = vmatprep.subr.mxu0 0.0
        %1031 = vmatpush1.msra.mxu0 0.0
        %1032 = vmatprep.subr.mxu0 0.0
        %1033 = vmatpush1.msra.mxu0 0.0
        %1034 = vmatprep.subr.mxu0 0.0
        %1035 = vmatpush1.msra.mxu0 0.0
        %1036 = vmatprep.subr.mxu0 0.0
        %1037 = vmatpush1.msra.mxu0 0.0
        %1038 = vmatprep.subr.mxu0 0.0
        %1039 = vmatpush1.msra.mxu0 0.0
        %1040 = vmatprep.subr.mxu0 0.0
        %1041 = vmatpush1.msra.mxu0 0.0
        %1042 = vmatprep.subr.mxu0 0.0
        %1043 = vmatpush1.msra.mxu0 0.0
        %1044 = vmatprep.subr.mxu0 0.0
        %1045 = vmatpush1.msra.mxu0 0.0
        %1046 = vmatprep.subr.mxu0 0.0
        %1047 = vmatpush1.msra.mxu0 0.0
        %1048 = vmatprep.subr.mxu0 0.0
        %1049 = vmatpush1.msra.mxu0 0.0
        %1050 = vmatprep.subr.mxu0 0.0
        %1051 = vmatpush1.msra.mxu0 0.0
        %1052 = vmatprep.mubr.f32.mxu0 0.0
        %1053 = vmatmul.mubr.f32.gmra.mrb[0].mxu0 %v983
        %v1054 = vpop.f32.mrb[0].mxu0
        %v1055 = vadd.f32 0.0, %v1054
        %v1056 = vpop.f32.mrb[0].mxu0
        %1057 = vmatprep.mubr.f32.mxu0 0.0
        %1058 = vmatmul.mubr.f32.gmra.mrb[0].mxu0 %v986
        %v1059 = vpop.f32.mrb[0].mxu0
        %v1060 = vadd.f32 0.0, %v1059
        %v1061 = vpop.f32.mrb[0].mxu0
        %1062 = vdwg.mxu0
        %v1064 = vsel %vm735, %v968, 0
        %v1067 = vsel %vm735, %v969, 0
        %1069 = vmatprep.subr.mxu0 0.0
        %1070 = vmatpush1.msra.mxu0 %v959
        %1071 = vmatprep.subr.mxu0 0.0
        %1072 = vmatpush1.msra.mxu0 0.0
        %1073 = vmatprep.subr.mxu0 0.0
        %1074 = vmatpush1.msra.mxu0 0.0
        %1075 = vmatprep.subr.mxu0 0.0
        %1076 = vmatpush1.msra.mxu0 0.0
        %1077 = vmatprep.subr.mxu0 0.0
        %1078 = vmatpush1.msra.mxu0 0.0
        %1079 = vmatprep.subr.mxu0 0.0
        %1080 = vmatpush1.msra.mxu0 0.0
        %1081 = vmatprep.subr.mxu0 0.0
        %1082 = vmatpush1.msra.mxu0 0.0
        %1083 = vmatprep.subr.mxu0 0.0
        %1084 = vmatpush1.msra.mxu0 0.0
        %1085 = vmatprep.subr.mxu0 0.0
        %1086 = vmatpush1.msra.mxu0 0.0
        %1087 = vmatprep.subr.mxu0 0.0
        %1088 = vmatpush1.msra.mxu0 0.0
        %1089 = vmatprep.subr.mxu0 0.0
        %1090 = vmatpush1.msra.mxu0 0.0
        %1091 = vmatprep.subr.mxu0 0.0
        %1092 = vmatpush1.msra.mxu0 0.0
        %1093 = vmatprep.subr.mxu0 0.0
        %1094 = vmatpush1.msra.mxu0 0.0
        %1095 = vmatprep.subr.mxu0 0.0
        %1096 = vmatpush1.msra.mxu0 0.0
        %1097 = vmatprep.subr.mxu0 0.0
        %1098 = vmatpush1.msra.mxu0 0.0
        %1099 = vmatprep.subr.mxu0 0.0
        %1100 = vmatpush1.msra.mxu0 0.0
        %1101 = vmatprep.subr.mxu0 0.0
        %1102 = vmatpush1.msra.mxu0 0.0
        %1103 = vmatprep.subr.mxu0 0.0
        %1104 = vmatpush1.msra.mxu0 0.0
        %1105 = vmatprep.subr.mxu0 0.0
        %1106 = vmatpush1.msra.mxu0 0.0
        %1107 = vmatprep.subr.mxu0 0.0
        %1108 = vmatpush1.msra.mxu0 0.0
        %1109 = vmatprep.subr.mxu0 0.0
        %1110 = vmatpush1.msra.mxu0 0.0
        %1111 = vmatprep.subr.mxu0 0.0
        %1112 = vmatpush1.msra.mxu0 0.0
        %1113 = vmatprep.subr.mxu0 0.0
        %1114 = vmatpush1.msra.mxu0 0.0
        %1115 = vmatprep.subr.mxu0 0.0
        %1116 = vmatpush1.msra.mxu0 0.0
        %1117 = vmatprep.subr.mxu0 0.0
        %1118 = vmatpush1.msra.mxu0 0.0
        %1119 = vmatprep.subr.mxu0 0.0
        %1120 = vmatpush1.msra.mxu0 0.0
        %1121 = vmatprep.subr.mxu0 0.0
        %1122 = vmatpush1.msra.mxu0 0.0
        %1123 = vmatprep.subr.mxu0 0.0
        %1124 = vmatpush1.msra.mxu0 0.0
        %1125 = vmatprep.subr.mxu0 0.0
        %1126 = vmatpush1.msra.mxu0 0.0
        %1127 = vmatprep.subr.mxu0 0.0
        %1128 = vmatpush1.msra.mxu0 0.0
        %1129 = vmatprep.subr.mxu0 0.0
        %1130 = vmatpush1.msra.mxu0 0.0
        %1131 = vmatprep.subr.mxu0 0.0
        %1132 = vmatpush1.msra.mxu0 0.0
        %1133 = vmatprep.mubr.f32.mxu0 0.0
        %1134 = vmatmul.mubr.f32.gmra.mrb[0].mxu0 %v1064
        %v1135 = vpop.f32.mrb[0].mxu0
        %v1136 = vadd.f32 0.0, %v1135
        %v1137 = vpop.f32.mrb[0].mxu0
        %1138 = vmatprep.mubr.f32.mxu0 0.0
        %1139 = vmatmul.mubr.f32.gmra.mrb[0].mxu0 %v1067
        %v1140 = vpop.f32.mrb[0].mxu0
        %v1141 = vadd.f32 0.0, %v1140
        %v1142 = vpop.f32.mrb[0].mxu0
        %1143 = vdwg.mxu0
        %v1145 = vsel %vm735, %v970, 0
        %v1148 = vsel %vm735, %v971, 0
        %1150 = vmatprep.subr.mxu0 0.0
        %1151 = vmatpush1.msra.mxu0 %v960
        %1152 = vmatprep.subr.mxu0 0.0
        %1153 = vmatpush1.msra.mxu0 0.0
        %1154 = vmatprep.subr.mxu0 0.0
        %1155 = vmatpush1.msra.mxu0 0.0
        %1156 = vmatprep.subr.mxu0 0.0
        %1157 = vmatpush1.msra.mxu0 0.0
        %1158 = vmatprep.subr.mxu0 0.0
        %1159 = vmatpush1.msra.mxu0 0.0
        %1160 = vmatprep.subr.mxu0 0.0
        %1161 = vmatpush1.msra.mxu0 0.0
        %1162 = vmatprep.subr.mxu0 0.0
        %1163 = vmatpush1.msra.mxu0 0.0
        %1164 = vmatprep.subr.mxu0 0.0
        %1165 = vmatpush1.msra.mxu0 0.0
        %1166 = vmatprep.subr.mxu0 0.0
        %1167 = vmatpush1.msra.mxu0 0.0
        %1168 = vmatprep.subr.mxu0 0.0
        %1169 = vmatpush1.msra.mxu0 0.0
        %1170 = vmatprep.subr.mxu0 0.0
        %1171 = vmatpush1.msra.mxu0 0.0
        %1172 = vmatprep.subr.mxu0 0.0
        %1173 = vmatpush1.msra.mxu0 0.0
        %1174 = vmatprep.subr.mxu0 0.0
        %1175 = vmatpush1.msra.mxu0 0.0
        %1176 = vmatprep.subr.mxu0 0.0
        %1177 = vmatpush1.msra.mxu0 0.0
        %1178 = vmatprep.subr.mxu0 0.0
        %1179 = vmatpush1.msra.mxu0 0.0
        %1180 = vmatprep.subr.mxu0 0.0
        %1181 = vmatpush1.msra.mxu0 0.0
        %1182 = vmatprep.subr.mxu0 0.0
        %1183 = vmatpush1.msra.mxu0 0.0
        %1184 = vmatprep.subr.mxu0 0.0
        %1185 = vmatpush1.msra.mxu0 0.0
        %1186 = vmatprep.subr.mxu0 0.0
        %1187 = vmatpush1.msra.mxu0 0.0
        %1188 = vmatprep.subr.mxu0 0.0
        %1189 = vmatpush1.msra.mxu0 0.0
        %1190 = vmatprep.subr.mxu0 0.0
        %1191 = vmatpush1.msra.mxu0 0.0
        %1192 = vmatprep.subr.mxu0 0.0
        %1193 = vmatpush1.msra.mxu0 0.0
        %1194 = vmatprep.subr.mxu0 0.0
        %1195 = vmatpush1.msra.mxu0 0.0
        %1196 = vmatprep.subr.mxu0 0.0
        %1197 = vmatpush1.msra.mxu0 0.0
        %1198 = vmatprep.subr.mxu0 0.0
        %1199 = vmatpush1.msra.mxu0 0.0
        %1200 = vmatprep.subr.mxu0 0.0
        %1201 = vmatpush1.msra.mxu0 0.0
        %1202 = vmatprep.subr.mxu0 0.0
        %1203 = vmatpush1.msra.mxu0 0.0
        %1204 = vmatprep.subr.mxu0 0.0
        %1205 = vmatpush1.msra.mxu0 0.0
        %1206 = vmatprep.subr.mxu0 0.0
        %1207 = vmatpush1.msra.mxu0 0.0
        %1208 = vmatprep.subr.mxu0 0.0
        %1209 = vmatpush1.msra.mxu0 0.0
        %1210 = vmatprep.subr.mxu0 0.0
        %1211 = vmatpush1.msra.mxu0 0.0
        %1212 = vmatprep.subr.mxu0 0.0
        %1213 = vmatpush1.msra.mxu0 0.0
        %1214 = vmatprep.mubr.f32.mxu0 0.0
        %1215 = vmatmul.mubr.f32.gmra.mrb[0].mxu0 %v1145
        %v1216 = vpop.f32.mrb[0].mxu0
        %v1217 = vadd.f32 0.0, %v1216
        %v1218 = vpop.f32.mrb[0].mxu0
        %1219 = vmatprep.mubr.f32.mxu0 0.0
        %1220 = vmatmul.mubr.f32.gmra.mrb[0].mxu0 %v1148
        %v1221 = vpop.f32.mrb[0].mxu0
        %v1222 = vadd.f32 0.0, %v1221
        %v1223 = vpop.f32.mrb[0].mxu0
        %1224 = vdwg.mxu0
        %v1226 = vsel %vm735, %v972, 0
        %v1229 = vsel %vm735, %v973, 0
        %1231 = vmatprep.subr.mxu0 0.0
        %1232 = vmatpush1.msra.mxu0 %v961
        %1233 = vmatprep.subr.mxu0 0.0
        %1234 = vmatpush1.msra.mxu0 0.0
        %1235 = vmatprep.subr.mxu0 0.0
        %1236 = vmatpush1.msra.mxu0 0.0
        %1237 = vmatprep.subr.mxu0 0.0
        %1238 = vmatpush1.msra.mxu0 0.0
        %1239 = vmatprep.subr.mxu0 0.0
        %1240 = vmatpush1.msra.mxu0 0.0
        %1241 = vmatprep.subr.mxu0 0.0
        %1242 = vmatpush1.msra.mxu0 0.0
        %1243 = vmatprep.subr.mxu0 0.0
        %1244 = vmatpush1.msra.mxu0 0.0
        %1245 = vmatprep.subr.mxu0 0.0
        %1246 = vmatpush1.msra.mxu0 0.0
        %1247 = vmatprep.subr.mxu0 0.0
        %1248 = vmatpush1.msra.mxu0 0.0
        %1249 = vmatprep.subr.mxu0 0.0
        %1250 = vmatpush1.msra.mxu0 0.0
        %1251 = vmatprep.subr.mxu0 0.0
        %1252 = vmatpush1.msra.mxu0 0.0
        %1253 = vmatprep.subr.mxu0 0.0
        %1254 = vmatpush1.msra.mxu0 0.0
        %1255 = vmatprep.subr.mxu0 0.0
        %1256 = vmatpush1.msra.mxu0 0.0
        %1257 = vmatprep.subr.mxu0 0.0
        %1258 = vmatpush1.msra.mxu0 0.0
        %1259 = vmatprep.subr.mxu0 0.0
        %1260 = vmatpush1.msra.mxu0 0.0
        %1261 = vmatprep.subr.mxu0 0.0
        %1262 = vmatpush1.msra.mxu0 0.0
        %1263 = vmatprep.subr.mxu0 0.0
        %1264 = vmatpush1.msra.mxu0 0.0
        %1265 = vmatprep.subr.mxu0 0.0
        %1266 = vmatpush1.msra.mxu0 0.0
        %1267 = vmatprep.subr.mxu0 0.0
        %1268 = vmatpush1.msra.mxu0 0.0
        %1269 = vmatprep.subr.mxu0 0.0
        %1270 = vmatpush1.msra.mxu0 0.0
        %1271 = vmatprep.subr.mxu0 0.0
        %1272 = vmatpush1.msra.mxu0 0.0
        %1273 = vmatprep.subr.mxu0 0.0
        %1274 = vmatpush1.msra.mxu0 0.0
        %1275 = vmatprep.subr.mxu0 0.0
        %1276 = vmatpush1.msra.mxu0 0.0
        %1277 = vmatprep.subr.mxu0 0.0
        %1278 = vmatpush1.msra.mxu0 0.0
        %1279 = vmatprep.subr.mxu0 0.0
        %1280 = vmatpush1.msra.mxu0 0.0
        %1281 = vmatprep.subr.mxu0 0.0
        %1282 = vmatpush1.msra.mxu0 0.0
        %1283 = vmatprep.subr.mxu0 0.0
        %1284 = vmatpush1.msra.mxu0 0.0
        %1285 = vmatprep.subr.mxu0 0.0
        %1286 = vmatpush1.msra.mxu0 0.0
        %1287 = vmatprep.subr.mxu0 0.0
        %1288 = vmatpush1.msra.mxu0 0.0
        %1289 = vmatprep.subr.mxu0 0.0
        %1290 = vmatpush1.msra.mxu0 0.0
        %1291 = vmatprep.subr.mxu0 0.0
        %1292 = vmatpush1.msra.mxu0 0.0
        %1293 = vmatprep.subr.mxu0 0.0
        %1294 = vmatpush1.msra.mxu0 0.0
        %1295 = vmatprep.mubr.f32.mxu0 0.0
        %1296 = vmatmul.mubr.f32.gmra.mrb[0].mxu0 %v1226
        %v1297 = vpop.f32.mrb[0].mxu0
        %v1298 = vadd.f32 0.0, %v1297
        %v1299 = vpop.f32.mrb[0].mxu0
        %1300 = vmatprep.mubr.f32.mxu0 0.0
        %1301 = vmatmul.mubr.f32.gmra.mrb[0].mxu0 %v1229
        %v1302 = vpop.f32.mrb[0].mxu0
        %v1303 = vadd.f32 0.0, %v1302
        %v1304 = vpop.f32.mrb[0].mxu0
        %1305 = vdwg.mxu0
        %v1307 = vsel %vm735, %v974, 0
        %v1310 = vsel %vm735, %v975, 0
        %1312 = vmatprep.subr.mxu0 0.0
        %1313 = vmatpush1.msra.mxu0 %v962
        %1314 = vmatprep.subr.mxu0 0.0
        %1315 = vmatpush1.msra.mxu0 0.0
        %1316 = vmatprep.subr.mxu0 0.0
        %1317 = vmatpush1.msra.mxu0 0.0
        %1318 = vmatprep.subr.mxu0 0.0
        %1319 = vmatpush1.msra.mxu0 0.0
        %1320 = vmatprep.subr.mxu0 0.0
        %1321 = vmatpush1.msra.mxu0 0.0
        %1322 = vmatprep.subr.mxu0 0.0
        %1323 = vmatpush1.msra.mxu0 0.0
        %1324 = vmatprep.subr.mxu0 0.0
        %1325 = vmatpush1.msra.mxu0 0.0
        %1326 = vmatprep.subr.mxu0 0.0
        %1327 = vmatpush1.msra.mxu0 0.0
        %1328 = vmatprep.subr.mxu0 0.0
        %1329 = vmatpush1.msra.mxu0 0.0
        %1330 = vmatprep.subr.mxu0 0.0
        %1331 = vmatpush1.msra.mxu0 0.0
        %1332 = vmatprep.subr.mxu0 0.0
        %1333 = vmatpush1.msra.mxu0 0.0
        %1334 = vmatprep.subr.mxu0 0.0
        %1335 = vmatpush1.msra.mxu0 0.0
        %1336 = vmatprep.subr.mxu0 0.0
        %1337 = vmatpush1.msra.mxu0 0.0
        %1338 = vmatprep.subr.mxu0 0.0
        %1339 = vmatpush1.msra.mxu0 0.0
        %1340 = vmatprep.subr.mxu0 0.0
        %1341 = vmatpush1.msra.mxu0 0.0
        %1342 = vmatprep.subr.mxu0 0.0
        %1343 = vmatpush1.msra.mxu0 0.0
        %1344 = vmatprep.subr.mxu0 0.0
        %1345 = vmatpush1.msra.mxu0 0.0
        %1346 = vmatprep.subr.mxu0 0.0
        %1347 = vmatpush1.msra.mxu0 0.0
        %1348 = vmatprep.subr.mxu0 0.0
        %1349 = vmatpush1.msra.mxu0 0.0
        %1350 = vmatprep.subr.mxu0 0.0
        %1351 = vmatpush1.msra.mxu0 0.0
        %1352 = vmatprep.subr.mxu0 0.0
        %1353 = vmatpush1.msra.mxu0 0.0
        %1354 = vmatprep.subr.mxu0 0.0
        %1355 = vmatpush1.msra.mxu0 0.0
        %1356 = vmatprep.subr.mxu0 0.0
        %1357 = vmatpush1.msra.mxu0 0.0
        %1358 = vmatprep.subr.mxu0 0.0
        %1359 = vmatpush1.msra.mxu0 0.0
        %1360 = vmatprep.subr.mxu0 0.0
        %1361 = vmatpush1.msra.mxu0 0.0
        %1362 = vmatprep.subr.mxu0 0.0
        %1363 = vmatpush1.msra.mxu0 0.0
        %1364 = vmatprep.subr.mxu0 0.0
        %1365 = vmatpush1.msra.mxu0 0.0
        %1366 = vmatprep.subr.mxu0 0.0
        %1367 = vmatpush1.msra.mxu0 0.0
        %1368 = vmatprep.subr.mxu0 0.0
        %1369 = vmatpush1.msra.mxu0 0.0
        %1370 = vmatprep.subr.mxu0 0.0
        %1371 = vmatpush1.msra.mxu0 0.0
        %1372 = vmatprep.subr.mxu0 0.0
        %1373 = vmatpush1.msra.mxu0 0.0
        %1374 = vmatprep.subr.mxu0 0.0
        %1375 = vmatpush1.msra.mxu0 0.0
        %1376 = vmatprep.mubr.f32.mxu0 0.0
        %1377 = vmatmul.mubr.f32.gmra.mrb[0].mxu0 %v1307
        %v1378 = vpop.f32.mrb[0].mxu0
        %v1379 = vadd.f32 0.0, %v1378
        %v1380 = vpop.f32.mrb[0].mxu0
        %1381 = vmatprep.mubr.f32.mxu0 0.0
        %1382 = vmatmul.mubr.f32.gmra.mrb[0].mxu0 %v1310
        %v1383 = vpop.f32.mrb[0].mxu0
        %v1384 = vadd.f32 0.0, %v1383
        %v1385 = vpop.f32.mrb[0].mxu0
        %1386 = vdwg.mxu0
        %v1388 = vsel %vm735, %v976, 0
        %v1391 = vsel %vm735, %v977, 0
        %1393 = vmatprep.subr.mxu0 0.0
        %1394 = vmatpush1.msra.mxu0 %v963
        %1395 = vmatprep.subr.mxu0 0.0
        %1396 = vmatpush1.msra.mxu0 0.0
        %1397 = vmatprep.subr.mxu0 0.0
        %1398 = vmatpush1.msra.mxu0 0.0
        %1399 = vmatprep.subr.mxu0 0.0
        %1400 = vmatpush1.msra.mxu0 0.0
        %1401 = vmatprep.subr.mxu0 0.0
        %1402 = vmatpush1.msra.mxu0 0.0
        %1403 = vmatprep.subr.mxu0 0.0
        %1404 = vmatpush1.msra.mxu0 0.0
        %1405 = vmatprep.subr.mxu0 0.0
        %1406 = vmatpush1.msra.mxu0 0.0
        %1407 = vmatprep.subr.mxu0 0.0
        %1408 = vmatpush1.msra.mxu0 0.0
        %1409 = vmatprep.subr.mxu0 0.0
        %1410 = vmatpush1.msra.mxu0 0.0
        %1411 = vmatprep.subr.mxu0 0.0
        %1412 = vmatpush1.msra.mxu0 0.0
        %1413 = vmatprep.subr.mxu0 0.0
        %1414 = vmatpush1.msra.mxu0 0.0
        %1415 = vmatprep.subr.mxu0 0.0
        %1416 = vmatpush1.msra.mxu0 0.0
        %1417 = vmatprep.subr.mxu0 0.0
        %1418 = vmatpush1.msra.mxu0 0.0
        %1419 = vmatprep.subr.mxu0 0.0
        %1420 = vmatpush1.msra.mxu0 0.0
        %1421 = vmatprep.subr.mxu0 0.0
        %1422 = vmatpush1.msra.mxu0 0.0
        %1423 = vmatprep.subr.mxu0 0.0
        %1424 = vmatpush1.msra.mxu0 0.0
        %1425 = vmatprep.subr.mxu0 0.0
        %1426 = vmatpush1.msra.mxu0 0.0
        %1427 = vmatprep.subr.mxu0 0.0
        %1428 = vmatpush1.msra.mxu0 0.0
        %1429 = vmatprep.subr.mxu0 0.0
        %1430 = vmatpush1.msra.mxu0 0.0
        %1431 = vmatprep.subr.mxu0 0.0
        %1432 = vmatpush1.msra.mxu0 0.0
        %1433 = vmatprep.subr.mxu0 0.0
        %1434 = vmatpush1.msra.mxu0 0.0
        %1435 = vmatprep.subr.mxu0 0.0
        %1436 = vmatpush1.msra.mxu0 0.0
        %1437 = vmatprep.subr.mxu0 0.0
        %1438 = vmatpush1.msra.mxu0 0.0
        %1439 = vmatprep.subr.mxu0 0.0
        %1440 = vmatpush1.msra.mxu0 0.0
        %1441 = vmatprep.subr.mxu0 0.0
        %1442 = vmatpush1.msra.mxu0 0.0
        %1443 = vmatprep.subr.mxu0 0.0
        %1444 = vmatpush1.msra.mxu0 0.0
        %1445 = vmatprep.subr.mxu0 0.0
        %1446 = vmatpush1.msra.mxu0 0.0
        %1447 = vmatprep.subr.mxu0 0.0
        %1448 = vmatpush1.msra.mxu0 0.0
        %1449 = vmatprep.subr.mxu0 0.0
        %1450 = vmatpush1.msra.mxu0 0.0
        %1451 = vmatprep.subr.mxu0 0.0
        %1452 = vmatpush1.msra.mxu0 0.0
        %1453 = vmatprep.subr.mxu0 0.0
        %1454 = vmatpush1.msra.mxu0 0.0
        %1455 = vmatprep.subr.mxu0 0.0
        %1456 = vmatpush1.msra.mxu0 0.0
        %1457 = vmatprep.mubr.f32.mxu0 0.0
        %1458 = vmatmul.mubr.f32.gmra.mrb[0].mxu0 %v1388
        %v1459 = vpop.f32.mrb[0].mxu0
        %v1460 = vadd.f32 0.0, %v1459
        %v1461 = vpop.f32.mrb[0].mxu0
        %1462 = vmatprep.mubr.f32.mxu0 0.0
        %1463 = vmatmul.mubr.f32.gmra.mrb[0].mxu0 %v1391
        %v1464 = vpop.f32.mrb[0].mxu0
        %v1465 = vadd.f32 0.0, %v1464
        %v1466 = vpop.f32.mrb[0].mxu0
        %1467 = vdwg.mxu0
        %v1469 = vsel %vm735, %v978, 0
        %v1472 = vsel %vm735, %v979, 0
        %1474 = vmatprep.subr.mxu0 0.0
        %1475 = vmatpush1.msra.mxu0 %v964
        %1476 = vmatprep.subr.mxu0 0.0
        %1477 = vmatpush1.msra.mxu0 0.0
        %1478 = vmatprep.subr.mxu0 0.0
        %1479 = vmatpush1.msra.mxu0 0.0
        %1480 = vmatprep.subr.mxu0 0.0
        %1481 = vmatpush1.msra.mxu0 0.0
        %1482 = vmatprep.subr.mxu0 0.0
        %1483 = vmatpush1.msra.mxu0 0.0
        %1484 = vmatprep.subr.mxu0 0.0
        %1485 = vmatpush1.msra.mxu0 0.0
        %1486 = vmatprep.subr.mxu0 0.0
        %1487 = vmatpush1.msra.mxu0 0.0
        %1488 = vmatprep.subr.mxu0 0.0
        %1489 = vmatpush1.msra.mxu0 0.0
        %1490 = vmatprep.subr.mxu0 0.0
        %1491 = vmatpush1.msra.mxu0 0.0
        %1492 = vmatprep.subr.mxu0 0.0
        %1493 = vmatpush1.msra.mxu0 0.0
        %1494 = vmatprep.subr.mxu0 0.0
        %1495 = vmatpush1.msra.mxu0 0.0
        %1496 = vmatprep.subr.mxu0 0.0
        %1497 = vmatpush1.msra.mxu0 0.0
        %1498 = vmatprep.subr.mxu0 0.0
        %1499 = vmatpush1.msra.mxu0 0.0
        %1500 = vmatprep.subr.mxu0 0.0
        %1501 = vmatpush1.msra.mxu0 0.0
        %1502 = vmatprep.subr.mxu0 0.0
        %1503 = vmatpush1.msra.mxu0 0.0
        %1504 = vmatprep.subr.mxu0 0.0
        %1505 = vmatpush1.msra.mxu0 0.0
        %1506 = vmatprep.subr.mxu0 0.0
        %1507 = vmatpush1.msra.mxu0 0.0
        %1508 = vmatprep.subr.mxu0 0.0
        %1509 = vmatpush1.msra.mxu0 0.0
        %1510 = vmatprep.subr.mxu0 0.0
        %1511 = vmatpush1.msra.mxu0 0.0
        %1512 = vmatprep.subr.mxu0 0.0
        %1513 = vmatpush1.msra.mxu0 0.0
        %1514 = vmatprep.subr.mxu0 0.0
        %1515 = vmatpush1.msra.mxu0 0.0
        %1516 = vmatprep.subr.mxu0 0.0
        %1517 = vmatpush1.msra.mxu0 0.0
        %1518 = vmatprep.subr.mxu0 0.0
        %1519 = vmatpush1.msra.mxu0 0.0
        %1520 = vmatprep.subr.mxu0 0.0
        %1521 = vmatpush1.msra.mxu0 0.0
        %1522 = vmatprep.subr.mxu0 0.0
        %1523 = vmatpush1.msra.mxu0 0.0
        %1524 = vmatprep.subr.mxu0 0.0
        %1525 = vmatpush1.msra.mxu0 0.0
        %1526 = vmatprep.subr.mxu0 0.0
        %1527 = vmatpush1.msra.mxu0 0.0
        %1528 = vmatprep.subr.mxu0 0.0
        %1529 = vmatpush1.msra.mxu0 0.0
        %1530 = vmatprep.subr.mxu0 0.0
        %1531 = vmatpush1.msra.mxu0 0.0
        %1532 = vmatprep.subr.mxu0 0.0
        %1533 = vmatpush1.msra.mxu0 0.0
        %1534 = vmatprep.subr.mxu0 0.0
        %1535 = vmatpush1.msra.mxu0 0.0
        %1536 = vmatprep.subr.mxu0 0.0
        %1537 = vmatpush1.msra.mxu0 0.0
        %1538 = vmatprep.mubr.f32.mxu0 0.0
        %1539 = vmatmul.mubr.f32.gmra.mrb[0].mxu0 %v1469
        %v1540 = vpop.f32.mrb[0].mxu0
        %v1541 = vadd.f32 0.0, %v1540
        %v1542 = vpop.f32.mrb[0].mxu0
        %1543 = vmatprep.mubr.f32.mxu0 0.0
        %1544 = vmatmul.mubr.f32.gmra.mrb[0].mxu0 %v1472
        %v1545 = vpop.f32.mrb[0].mxu0
        %v1546 = vadd.f32 0.0, %v1545
        %v1547 = vpop.f32.mrb[0].mxu0
        %1548 = vdwg.mxu0
        %v1550 = vsel %vm735, %v980, 0
        %v1553 = vsel %vm735, %v981, 0
        %1555 = vmatprep.subr.mxu0 0.0
        %1556 = vmatpush1.msra.mxu0 %v965
        %1557 = vmatprep.subr.mxu0 0.0
        %1558 = vmatpush1.msra.mxu0 0.0
        %1559 = vmatprep.subr.mxu0 0.0
        %1560 = vmatpush1.msra.mxu0 0.0
        %1561 = vmatprep.subr.mxu0 0.0
        %1562 = vmatpush1.msra.mxu0 0.0
        %1563 = vmatprep.subr.mxu0 0.0
        %1564 = vmatpush1.msra.mxu0 0.0
        %1565 = vmatprep.subr.mxu0 0.0
        %1566 = vmatpush1.msra.mxu0 0.0
        %1567 = vmatprep.subr.mxu0 0.0
        %1568 = vmatpush1.msra.mxu0 0.0
        %1569 = vmatprep.subr.mxu0 0.0
        %1570 = vmatpush1.msra.mxu0 0.0
        %1571 = vmatprep.subr.mxu0 0.0
        %1572 = vmatpush1.msra.mxu0 0.0
        %1573 = vmatprep.subr.mxu0 0.0
        %1574 = vmatpush1.msra.mxu0 0.0
        %1575 = vmatprep.subr.mxu0 0.0
        %1576 = vmatpush1.msra.mxu0 0.0
        %1577 = vmatprep.subr.mxu0 0.0
        %1578 = vmatpush1.msra.mxu0 0.0
        %1579 = vmatprep.subr.mxu0 0.0
        %1580 = vmatpush1.msra.mxu0 0.0
        %1581 = vmatprep.subr.mxu0 0.0
        %1582 = vmatpush1.msra.mxu0 0.0
        %1583 = vmatprep.subr.mxu0 0.0
        %1584 = vmatpush1.msra.mxu0 0.0
        %1585 = vmatprep.subr.mxu0 0.0
        %1586 = vmatpush1.msra.mxu0 0.0
        %1587 = vmatprep.subr.mxu0 0.0
        %1588 = vmatpush1.msra.mxu0 0.0
        %1589 = vmatprep.subr.mxu0 0.0
        %1590 = vmatpush1.msra.mxu0 0.0
        %1591 = vmatprep.subr.mxu0 0.0
        %1592 = vmatpush1.msra.mxu0 0.0
        %1593 = vmatprep.subr.mxu0 0.0
        %1594 = vmatpush1.msra.mxu0 0.0
        %1595 = vmatprep.subr.mxu0 0.0
        %1596 = vmatpush1.msra.mxu0 0.0
        %1597 = vmatprep.subr.mxu0 0.0
        %1598 = vmatpush1.msra.mxu0 0.0
        %1599 = vmatprep.subr.mxu0 0.0
        %1600 = vmatpush1.msra.mxu0 0.0
        %1601 = vmatprep.subr.mxu0 0.0
        %1602 = vmatpush1.msra.mxu0 0.0
        %1603 = vmatprep.subr.mxu0 0.0
        %1604 = vmatpush1.msra.mxu0 0.0
        %1605 = vmatprep.subr.mxu0 0.0
        %1606 = vmatpush1.msra.mxu0 0.0
        %1607 = vmatprep.subr.mxu0 0.0
        %1608 = vmatpush1.msra.mxu0 0.0
        %1609 = vmatprep.subr.mxu0 0.0
        %1610 = vmatpush1.msra.mxu0 0.0
        %1611 = vmatprep.subr.mxu0 0.0
        %1612 = vmatpush1.msra.mxu0 0.0
        %1613 = vmatprep.subr.mxu0 0.0
        %1614 = vmatpush1.msra.mxu0 0.0
        %1615 = vmatprep.subr.mxu0 0.0
        %1616 = vmatpush1.msra.mxu0 0.0
        %1617 = vmatprep.subr.mxu0 0.0
        %1618 = vmatpush1.msra.mxu0 0.0
        %1619 = vmatprep.mubr.f32.mxu0 0.0
        %1620 = vmatmul.mubr.f32.gmra.mrb[0].mxu0 %v1550
        %v1621 = vpop.f32.mrb[0].mxu0
        %v1622 = vadd.f32 0.0, %v1621
        %v1623 = vpop.f32.mrb[0].mxu0
        %1624 = vmatprep.mubr.f32.mxu0 0.0
        %1625 = vmatmul.mubr.f32.gmra.mrb[0].mxu0 %v1553
        %v1626 = vpop.f32.mrb[0].mxu0
        %v1627 = vadd.f32 0.0, %v1626
        %v1628 = vpop.f32.mrb[0].mxu0
        %1629 = vdwg.mxu0
        %v1630 = vadd.f32 %v712, %v1055
        %v1631 = vadd.f32 %v713, %v1060
        %v1632 = vadd.f32 %v714, %v1136
        %v1633 = vadd.f32 %v715, %v1141
        %v1634 = vadd.f32 %v716, %v1217
        %v1635 = vadd.f32 %v717, %v1222
        %v1636 = vadd.f32 %v718, %v1298
        %v1637 = vadd.f32 %v719, %v1303
        %v1638 = vadd.f32 %v720, %v1379
        %v1639 = vadd.f32 %v721, %v1384
        %v1640 = vadd.f32 %v722, %v1460
        %v1641 = vadd.f32 %v723, %v1465
        %v1642 = vadd.f32 %v724, %v1541
        %v1643 = vadd.f32 %v725, %v1546
        %v1644 = vadd.f32 %v726, %v1622
        %v1645 = vadd.f32 %v727, %v1627
        %v1646 = vld [vmem:[%s667] sm:$0xf]
        %v1647 = vld [vmem:[%s671] sm:$0xf]
        %v1648 = vadd.f32 %v1646, %v1647
        %v1649 = vld [vmem:[%s679] sm:$0xff]
        %vm1650 = vcmask 31744
        %v1652 = vsel %vm1650, %v1649, 0
        %vm1654 = vcmask 1043456
        %v1656 = vsel %vm1654, %v1648, 0
        %1658 = vmatprep.subr.mxu0 0.0
        %1659 = vmatpush1.msra.mxu0 %v1656
        %1660 = vmatprep.subr.mxu0 0.0
        %1661 = vmatpush1.msra.mxu0 0.0
        %1662 = vmatprep.subr.mxu0 0.0
        %1663 = vmatpush1.msra.mxu0 0.0
        %1664 = vmatprep.subr.mxu0 0.0
        %1665 = vmatpush1.msra.mxu0 0.0
        %1666 = vmatprep.subr.mxu0 0.0
        %1667 = vmatpush1.msra.mxu0 0.0
        %1668 = vmatprep.subr.mxu0 0.0
        %1669 = vmatpush1.msra.mxu0 0.0
        %1670 = vmatprep.subr.mxu0 0.0
        %1671 = vmatpush1.msra.mxu0 0.0
        %1672 = vmatprep.subr.mxu0 0.0
        %1673 = vmatpush1.msra.mxu0 0.0
        %1674 = vmatprep.subr.mxu0 0.0
        %1675 = vmatpush1.msra.mxu0 0.0
        %1676 = vmatprep.subr.mxu0 0.0
        %1677 = vmatpush1.msra.mxu0 0.0
        %1678 = vmatprep.subr.mxu0 0.0
        %1679 = vmatpush1.msra.mxu0 0.0
        %1680 = vmatprep.subr.mxu0 0.0
        %1681 = vmatpush1.msra.mxu0 0.0
        %1682 = vmatprep.subr.mxu0 0.0
        %1683 = vmatpush1.msra.mxu0 0.0
        %1684 = vmatprep.subr.mxu0 0.0
        %1685 = vmatpush1.msra.mxu0 0.0
        %1686 = vmatprep.subr.mxu0 0.0
        %1687 = vmatpush1.msra.mxu0 0.0
        %1688 = vmatprep.subr.mxu0 0.0
        %1689 = vmatpush1.msra.mxu0 0.0
        %1690 = vmatprep.subr.mxu0 0.0
        %1691 = vmatpush1.msra.mxu0 0.0
        %1692 = vmatprep.subr.mxu0 0.0
        %1693 = vmatpush1.msra.mxu0 0.0
        %1694 = vmatprep.subr.mxu0 0.0
        %1695 = vmatpush1.msra.mxu0 0.0
        %1696 = vmatprep.subr.mxu0 0.0
        %1697 = vmatpush1.msra.mxu0 0.0
        %1698 = vmatprep.subr.mxu0 0.0
        %1699 = vmatpush1.msra.mxu0 0.0
        %1700 = vmatprep.subr.mxu0 0.0
        %1701 = vmatpush1.msra.mxu0 0.0
        %1702 = vmatprep.subr.mxu0 0.0
        %1703 = vmatpush1.msra.mxu0 0.0
        %1704 = vmatprep.subr.mxu0 0.0
        %1705 = vmatpush1.msra.mxu0 0.0
        %1706 = vmatprep.subr.mxu0 0.0
        %1707 = vmatpush1.msra.mxu0 0.0
        %1708 = vmatprep.subr.mxu0 0.0
        %1709 = vmatpush1.msra.mxu0 0.0
        %1710 = vmatprep.subr.mxu0 0.0
        %1711 = vmatpush1.msra.mxu0 0.0
        %1712 = vmatprep.subr.mxu0 0.0
        %1713 = vmatpush1.msra.mxu0 0.0
        %1714 = vmatprep.subr.mxu0 0.0
        %1715 = vmatpush1.msra.mxu0 0.0
        %1716 = vmatprep.subr.mxu0 0.0
        %1717 = vmatpush1.msra.mxu0 0.0
        %1718 = vmatprep.subr.mxu0 0.0
        %1719 = vmatpush1.msra.mxu0 0.0
        %1720 = vmatprep.subr.mxu0 0.0
        %1721 = vmatpush1.msra.mxu0 0.0
        %1722 = vmatprep.mubr.f32.mxu0 0.0
        %1723 = vmatmul.mubr.f32.gmra.mrb[0].mxu0 %v1652
        %v1724 = vpop.f32.mrb[0].mxu0
        %v1725 = vadd.f32 0.0, %v1724
        %v1726 = vpop.f32.mrb[0].mxu0
        %1727 = vdwg.mxu0
        %1729 = vrot.lane.b32.xlu0 %v1725, 96
        %v1730 = vpop.permute.xlu0 %1729
        %1732 = vrot.lane.b32.xlu0 %v1725, 64
        %v1733 = vpop.permute.xlu0 %1732
        %1735 = vrot.lane.b32.xlu0 %v1725, 32
        %v1736 = vpop.permute.xlu0 %1735
        %v1738 = vcombine.low %v1725, %v1733
        %v1739 = vcombine.high %v1725, %v1733
        %v1741 = vunpack.c.l.s4 1983009808
        %v1742 = vunpack.c.0.s8 %v1741
        %v1743 = vlaneseq
        %v1744 = vshrl.u32 %v1743, 7
        %v1745 = vsub.s32 %v1742, %v1744
        %v1746 = vrot.slane %v1738, %v1745
        %v1748 = vunpack.c.l.s4 1983009808
        %v1749 = vunpack.c.0.s8 %v1748
        %v1750 = vlaneseq
        %v1751 = vshrl.u32 %v1750, 7
        %v1752 = vsub.s32 %v1749, %v1751
        %v1753 = vrot.slane %v1739, %v1752
        %v1754 = vcombine.low %v1730, %v1736
        %v1755 = vcombine.high %v1730, %v1736
        %v1757 = vunpack.c.l.s4 1983009808
        %v1758 = vunpack.c.0.s8 %v1757
        %v1759 = vlaneseq
        %v1760 = vshrl.u32 %v1759, 7
        %v1761 = vsub.s32 %v1758, %v1760
        %v1762 = vrot.slane %v1754, %v1761
        %v1764 = vunpack.c.l.s4 1983009808
        %v1765 = vunpack.c.0.s8 %v1764
        %v1766 = vlaneseq
        %v1767 = vshrl.u32 %v1766, 7
        %v1768 = vsub.s32 %v1765, %v1767
        %v1769 = vrot.slane %v1755, %v1768
        %v1770 = vcombine.low %v1746, %v1762
        %v1771 = vcombine.high %v1746, %v1762
        %v1773 = vunpack.c.l.s4 1934713408
        %v1774 = vunpack.c.0.s8 %v1773
        %v1775 = vlaneseq
        %v1776 = vshrl.u32 %v1775, 7
        %v1777 = vsub.s32 %v1774, %v1776
        %v1778 = vrot.slane %v1770, %v1777
        %v1780 = vunpack.c.l.s4 1934713408
        %v1781 = vunpack.c.0.s8 %v1780
        %v1782 = vlaneseq
        %v1783 = vshrl.u32 %v1782, 7
        %v1784 = vsub.s32 %v1781, %v1783
        %v1785 = vrot.slane %v1771, %v1784
        %v1786 = vcombine.low %v1753, %v1769
        %v1787 = vcombine.high %v1753, %v1769
        %v1789 = vunpack.c.l.s4 1934713408
        %v1790 = vunpack.c.0.s8 %v1789
        %v1791 = vlaneseq
        %v1792 = vshrl.u32 %v1791, 7
        %v1793 = vsub.s32 %v1790, %v1792
        %v1794 = vrot.slane %v1786, %v1793
        %v1796 = vunpack.c.l.s4 1934713408
        %v1797 = vunpack.c.0.s8 %v1796
        %v1798 = vlaneseq
        %v1799 = vshrl.u32 %v1798, 7
        %v1800 = vsub.s32 %v1797, %v1799
        %v1801 = vrot.slane %v1787, %v1800
        %v1802 = vcombine.high %v1778, 0.0
        %v1803 = vcombine.high %v1785, 0.0
        %v1804 = vcombine.high %v1794, 0.0
        %v1805 = vcombine.high %v1801, 0.0
        %v1806 = vld [vmem:[%s9] sm:$0xff]
        %v1807 = vld [vmem:[%s9 + $0x8] sm:$0xff]
        %v1808 = vld [vmem:[%s9 + $0x10] sm:$0xff]
        %v1809 = vld [vmem:[%s9 + $0x18] sm:$0xff]
        %v1810 = vld [vmem:[%s9 + $0x20] sm:$0xff]
        %v1811 = vld [vmem:[%s9 + $0x28] sm:$0xff]
        %v1812 = vld [vmem:[%s9 + $0x30] sm:$0xff]
        %v1813 = vld [vmem:[%s9 + $0x38] sm:$0xff]
        %v1814 = vld [vmem:[%s9 + $0x40] sm:$0xff]
        %v1815 = vld [vmem:[%s9 + $0x48] sm:$0xff]
        %v1816 = vld [vmem:[%s9 + $0x50] sm:$0xff]
        %v1817 = vld [vmem:[%s9 + $0x58] sm:$0xff]
        %v1818 = vld [vmem:[%s9 + $0x60] sm:$0xff]
        %v1819 = vld [vmem:[%s9 + $0x68] sm:$0xff]
        %v1820 = vld [vmem:[%s9 + $0x70] sm:$0xff]
        %v1821 = vld [vmem:[%s9 + $0x78] sm:$0xff]
        %v1823 = vsel %vm1650, %v1806, 0
        %v1826 = vsel %vm1650, %v1807, 0
        %v1829 = vsel %vm1654, %v1778, 0
        %1831 = vmatprep.subr.mxu0 0.0
        %1832 = vmatpush1.msra.mxu0 %v1829
        %1833 = vmatprep.subr.mxu0 0.0
        %1834 = vmatpush1.msra.mxu0 0.0
        %1835 = vmatprep.subr.mxu0 0.0
        %1836 = vmatpush1.msra.mxu0 0.0
        %1837 = vmatprep.subr.mxu0 0.0
        %1838 = vmatpush1.msra.mxu0 0.0
        %1839 = vmatprep.subr.mxu0 0.0
        %1840 = vmatpush1.msra.mxu0 0.0
        %1841 = vmatprep.subr.mxu0 0.0
        %1842 = vmatpush1.msra.mxu0 0.0
        %1843 = vmatprep.subr.mxu0 0.0
        %1844 = vmatpush1.msra.mxu0 0.0
        %1845 = vmatprep.subr.mxu0 0.0
        %1846 = vmatpush1.msra.mxu0 0.0
        %1847 = vmatprep.subr.mxu0 0.0
        %1848 = vmatpush1.msra.mxu0 0.0
        %1849 = vmatprep.subr.mxu0 0.0
        %1850 = vmatpush1.msra.mxu0 0.0
        %1851 = vmatprep.subr.mxu0 0.0
        %1852 = vmatpush1.msra.mxu0 0.0
        %1853 = vmatprep.subr.mxu0 0.0
        %1854 = vmatpush1.msra.mxu0 0.0
        %1855 = vmatprep.subr.mxu0 0.0
        %1856 = vmatpush1.msra.mxu0 0.0
        %1857 = vmatprep.subr.mxu0 0.0
        %1858 = vmatpush1.msra.mxu0 0.0
        %1859 = vmatprep.subr.mxu0 0.0
        %1860 = vmatpush1.msra.mxu0 0.0
        %1861 = vmatprep.subr.mxu0 0.0
        %1862 = vmatpush1.msra.mxu0 0.0
        %1863 = vmatprep.subr.mxu0 0.0
        %1864 = vmatpush1.msra.mxu0 0.0
        %1865 = vmatprep.subr.mxu0 0.0
        %1866 = vmatpush1.msra.mxu0 0.0
        %1867 = vmatprep.subr.mxu0 0.0
        %1868 = vmatpush1.msra.mxu0 0.0
        %1869 = vmatprep.subr.mxu0 0.0
        %1870 = vmatpush1.msra.mxu0 0.0
        %1871 = vmatprep.subr.mxu0 0.0
        %1872 = vmatpush1.msra.mxu0 0.0
        %1873 = vmatprep.subr.mxu0 0.0
        %1874 = vmatpush1.msra.mxu0 0.0
        %1875 = vmatprep.subr.mxu0 0.0
        %1876 = vmatpush1.msra.mxu0 0.0
        %1877 = vmatprep.subr.mxu0 0.0
        %1878 = vmatpush1.msra.mxu0 0.0
        %1879 = vmatprep.subr.mxu0 0.0
        %1880 = vmatpush1.msra.mxu0 0.0
        %1881 = vmatprep.subr.mxu0 0.0
        %1882 = vmatpush1.msra.mxu0 0.0
        %1883 = vmatprep.subr.mxu0 0.0
        %1884 = vmatpush1.msra.mxu0 0.0
        %1885 = vmatprep.subr.mxu0 0.0
        %1886 = vmatpush1.msra.mxu0 0.0
        %1887 = vmatprep.subr.mxu0 0.0
        %1888 = vmatpush1.msra.mxu0 0.0
        %1889 = vmatprep.subr.mxu0 0.0
        %1890 = vmatpush1.msra.mxu0 0.0
        %1891 = vmatprep.subr.mxu0 0.0
        %1892 = vmatpush1.msra.mxu0 0.0
        %1893 = vmatprep.subr.mxu0 0.0
        %1894 = vmatpush1.msra.mxu0 0.0
        %1895 = vmatprep.mubr.f32.mxu0 0.0
        %1896 = vmatmul.mubr.f32.gmra.mrb[0].mxu0 %v1823
        %v1897 = vpop.f32.mrb[0].mxu0
        %v1898 = vadd.f32 0.0, %v1897
        %v1899 = vpop.f32.mrb[0].mxu0
        %1900 = vmatprep.mubr.f32.mxu0 0.0
        %1901 = vmatmul.mubr.f32.gmra.mrb[0].mxu0 %v1826
        %v1902 = vpop.f32.mrb[0].mxu0
        %v1903 = vadd.f32 0.0, %v1902
        %v1904 = vpop.f32.mrb[0].mxu0
        %1905 = vdwg.mxu0
        %v1907 = vsel %vm1650, %v1808, 0
        %v1910 = vsel %vm1650, %v1809, 0
        %v1913 = vsel %vm1654, %v1802, 0
        %1915 = vmatprep.subr.mxu0 0.0
        %1916 = vmatpush1.msra.mxu0 %v1913
        %1917 = vmatprep.subr.mxu0 0.0
        %1918 = vmatpush1.msra.mxu0 0.0
        %1919 = vmatprep.subr.mxu0 0.0
        %1920 = vmatpush1.msra.mxu0 0.0
        %1921 = vmatprep.subr.mxu0 0.0
        %1922 = vmatpush1.msra.mxu0 0.0
        %1923 = vmatprep.subr.mxu0 0.0
        %1924 = vmatpush1.msra.mxu0 0.0
        %1925 = vmatprep.subr.mxu0 0.0
        %1926 = vmatpush1.msra.mxu0 0.0
        %1927 = vmatprep.subr.mxu0 0.0
        %1928 = vmatpush1.msra.mxu0 0.0
        %1929 = vmatprep.subr.mxu0 0.0
        %1930 = vmatpush1.msra.mxu0 0.0
        %1931 = vmatprep.subr.mxu0 0.0
        %1932 = vmatpush1.msra.mxu0 0.0
        %1933 = vmatprep.subr.mxu0 0.0
        %1934 = vmatpush1.msra.mxu0 0.0
        %1935 = vmatprep.subr.mxu0 0.0
        %1936 = vmatpush1.msra.mxu0 0.0
        %1937 = vmatprep.subr.mxu0 0.0
        %1938 = vmatpush1.msra.mxu0 0.0
        %1939 = vmatprep.subr.mxu0 0.0
        %1940 = vmatpush1.msra.mxu0 0.0
        %1941 = vmatprep.subr.mxu0 0.0
        %1942 = vmatpush1.msra.mxu0 0.0
        %1943 = vmatprep.subr.mxu0 0.0
        %1944 = vmatpush1.msra.mxu0 0.0
        %1945 = vmatprep.subr.mxu0 0.0
        %1946 = vmatpush1.msra.mxu0 0.0
        %1947 = vmatprep.subr.mxu0 0.0
        %1948 = vmatpush1.msra.mxu0 0.0
        %1949 = vmatprep.subr.mxu0 0.0
        %1950 = vmatpush1.msra.mxu0 0.0
        %1951 = vmatprep.subr.mxu0 0.0
        %1952 = vmatpush1.msra.mxu0 0.0
        %1953 = vmatprep.subr.mxu0 0.0
        %1954 = vmatpush1.msra.mxu0 0.0
        %1955 = vmatprep.subr.mxu0 0.0
        %1956 = vmatpush1.msra.mxu0 0.0
        %1957 = vmatprep.subr.mxu0 0.0
        %1958 = vmatpush1.msra.mxu0 0.0
        %1959 = vmatprep.subr.mxu0 0.0
        %1960 = vmatpush1.msra.mxu0 0.0
        %1961 = vmatprep.subr.mxu0 0.0
        %1962 = vmatpush1.msra.mxu0 0.0
        %1963 = vmatprep.subr.mxu0 0.0
        %1964 = vmatpush1.msra.mxu0 0.0
        %1965 = vmatprep.subr.mxu0 0.0
        %1966 = vmatpush1.msra.mxu0 0.0
        %1967 = vmatprep.subr.mxu0 0.0
        %1968 = vmatpush1.msra.mxu0 0.0
        %1969 = vmatprep.subr.mxu0 0.0
        %1970 = vmatpush1.msra.mxu0 0.0
        %1971 = vmatprep.subr.mxu0 0.0
        %1972 = vmatpush1.msra.mxu0 0.0
        %1973 = vmatprep.subr.mxu0 0.0
        %1974 = vmatpush1.msra.mxu0 0.0
        %1975 = vmatprep.subr.mxu0 0.0
        %1976 = vmatpush1.msra.mxu0 0.0
        %1977 = vmatprep.subr.mxu0 0.0
        %1978 = vmatpush1.msra.mxu0 0.0
        %1979 = vmatprep.mubr.f32.mxu0 0.0
        %1980 = vmatmul.mubr.f32.gmra.mrb[0].mxu0 %v1907
        %v1981 = vpop.f32.mrb[0].mxu0
        %v1982 = vadd.f32 0.0, %v1981
        %v1983 = vpop.f32.mrb[0].mxu0
        %1984 = vmatprep.mubr.f32.mxu0 0.0
        %1985 = vmatmul.mubr.f32.gmra.mrb[0].mxu0 %v1910
        %v1986 = vpop.f32.mrb[0].mxu0
        %v1987 = vadd.f32 0.0, %v1986
        %v1988 = vpop.f32.mrb[0].mxu0
        %1989 = vdwg.mxu0
        %v1991 = vsel %vm1650, %v1810, 0
        %v1994 = vsel %vm1650, %v1811, 0
        %v1997 = vsel %vm1654, %v1785, 0
        %1999 = vmatprep.subr.mxu0 0.0
        %2000 = vmatpush1.msra.mxu0 %v1997
        %2001 = vmatprep.subr.mxu0 0.0
        %2002 = vmatpush1.msra.mxu0 0.0
        %2003 = vmatprep.subr.mxu0 0.0
        %2004 = vmatpush1.msra.mxu0 0.0
        %2005 = vmatprep.subr.mxu0 0.0
        %2006 = vmatpush1.msra.mxu0 0.0
        %2007 = vmatprep.subr.mxu0 0.0
        %2008 = vmatpush1.msra.mxu0 0.0
        %2009 = vmatprep.subr.mxu0 0.0
        %2010 = vmatpush1.msra.mxu0 0.0
        %2011 = vmatprep.subr.mxu0 0.0
        %2012 = vmatpush1.msra.mxu0 0.0
        %2013 = vmatprep.subr.mxu0 0.0
        %2014 = vmatpush1.msra.mxu0 0.0
        %2015 = vmatprep.subr.mxu0 0.0
        %2016 = vmatpush1.msra.mxu0 0.0
        %2017 = vmatprep.subr.mxu0 0.0
        %2018 = vmatpush1.msra.mxu0 0.0
        %2019 = vmatprep.subr.mxu0 0.0
        %2020 = vmatpush1.msra.mxu0 0.0
        %2021 = vmatprep.subr.mxu0 0.0
        %2022 = vmatpush1.msra.mxu0 0.0
        %2023 = vmatprep.subr.mxu0 0.0
        %2024 = vmatpush1.msra.mxu0 0.0
        %2025 = vmatprep.subr.mxu0 0.0
        %2026 = vmatpush1.msra.mxu0 0.0
        %2027 = vmatprep.subr.mxu0 0.0
        %2028 = vmatpush1.msra.mxu0 0.0
        %2029 = vmatprep.subr.mxu0 0.0
        %2030 = vmatpush1.msra.mxu0 0.0
        %2031 = vmatprep.subr.mxu0 0.0
        %2032 = vmatpush1.msra.mxu0 0.0
        %2033 = vmatprep.subr.mxu0 0.0
        %2034 = vmatpush1.msra.mxu0 0.0
        %2035 = vmatprep.subr.mxu0 0.0
        %2036 = vmatpush1.msra.mxu0 0.0
        %2037 = vmatprep.subr.mxu0 0.0
        %2038 = vmatpush1.msra.mxu0 0.0
        %2039 = vmatprep.subr.mxu0 0.0
        %2040 = vmatpush1.msra.mxu0 0.0
        %2041 = vmatprep.subr.mxu0 0.0
        %2042 = vmatpush1.msra.mxu0 0.0
        %2043 = vmatprep.subr.mxu0 0.0
        %2044 = vmatpush1.msra.mxu0 0.0
        %2045 = vmatprep.subr.mxu0 0.0
        %2046 = vmatpush1.msra.mxu0 0.0
        %2047 = vmatprep.subr.mxu0 0.0
        %2048 = vmatpush1.msra.mxu0 0.0
        %2049 = vmatprep.subr.mxu0 0.0
        %2050 = vmatpush1.msra.mxu0 0.0
        %2051 = vmatprep.subr.mxu0 0.0
        %2052 = vmatpush1.msra.mxu0 0.0
        %2053 = vmatprep.subr.mxu0 0.0
        %2054 = vmatpush1.msra.mxu0 0.0
        %2055 = vmatprep.subr.mxu0 0.0
        %2056 = vmatpush1.msra.mxu0 0.0
        %2057 = vmatprep.subr.mxu0 0.0
        %2058 = vmatpush1.msra.mxu0 0.0
        %2059 = vmatprep.subr.mxu0 0.0
        %2060 = vmatpush1.msra.mxu0 0.0
        %2061 = vmatprep.subr.mxu0 0.0
        %2062 = vmatpush1.msra.mxu0 0.0
        %2063 = vmatprep.mubr.f32.mxu0 0.0
        %2064 = vmatmul.mubr.f32.gmra.mrb[0].mxu0 %v1991
        %v2065 = vpop.f32.mrb[0].mxu0
        %v2066 = vadd.f32 0.0, %v2065
        %v2067 = vpop.f32.mrb[0].mxu0
        %2068 = vmatprep.mubr.f32.mxu0 0.0
        %2069 = vmatmul.mubr.f32.gmra.mrb[0].mxu0 %v1994
        %v2070 = vpop.f32.mrb[0].mxu0
        %v2071 = vadd.f32 0.0, %v2070
        %v2072 = vpop.f32.mrb[0].mxu0
        %2073 = vdwg.mxu0
        %v2075 = vsel %vm1650, %v1812, 0
        %v2078 = vsel %vm1650, %v1813, 0
        %v2081 = vsel %vm1654, %v1803, 0
        %2083 = vmatprep.subr.mxu0 0.0
        %2084 = vmatpush1.msra.mxu0 %v2081
        %2085 = vmatprep.subr.mxu0 0.0
        %2086 = vmatpush1.msra.mxu0 0.0
        %2087 = vmatprep.subr.mxu0 0.0
        %2088 = vmatpush1.msra.mxu0 0.0
        %2089 = vmatprep.subr.mxu0 0.0
        %2090 = vmatpush1.msra.mxu0 0.0
        %2091 = vmatprep.subr.mxu0 0.0
        %2092 = vmatpush1.msra.mxu0 0.0
        %2093 = vmatprep.subr.mxu0 0.0
        %2094 = vmatpush1.msra.mxu0 0.0
        %2095 = vmatprep.subr.mxu0 0.0
        %2096 = vmatpush1.msra.mxu0 0.0
        %2097 = vmatprep.subr.mxu0 0.0
        %2098 = vmatpush1.msra.mxu0 0.0
        %2099 = vmatprep.subr.mxu0 0.0
        %2100 = vmatpush1.msra.mxu0 0.0
        %2101 = vmatprep.subr.mxu0 0.0
        %2102 = vmatpush1.msra.mxu0 0.0
        %2103 = vmatprep.subr.mxu0 0.0
        %2104 = vmatpush1.msra.mxu0 0.0
        %2105 = vmatprep.subr.mxu0 0.0
        %2106 = vmatpush1.msra.mxu0 0.0
        %2107 = vmatprep.subr.mxu0 0.0
        %2108 = vmatpush1.msra.mxu0 0.0
        %2109 = vmatprep.subr.mxu0 0.0
        %2110 = vmatpush1.msra.mxu0 0.0
        %2111 = vmatprep.subr.mxu0 0.0
        %2112 = vmatpush1.msra.mxu0 0.0
        %2113 = vmatprep.subr.mxu0 0.0
        %2114 = vmatpush1.msra.mxu0 0.0
        %2115 = vmatprep.subr.mxu0 0.0
        %2116 = vmatpush1.msra.mxu0 0.0
        %2117 = vmatprep.subr.mxu0 0.0
        %2118 = vmatpush1.msra.mxu0 0.0
        %2119 = vmatprep.subr.mxu0 0.0
        %2120 = vmatpush1.msra.mxu0 0.0
        %2121 = vmatprep.subr.mxu0 0.0
        %2122 = vmatpush1.msra.mxu0 0.0
        %2123 = vmatprep.subr.mxu0 0.0
        %2124 = vmatpush1.msra.mxu0 0.0
        %2125 = vmatprep.subr.mxu0 0.0
        %2126 = vmatpush1.msra.mxu0 0.0
        %2127 = vmatprep.subr.mxu0 0.0
        %2128 = vmatpush1.msra.mxu0 0.0
        %2129 = vmatprep.subr.mxu0 0.0
        %2130 = vmatpush1.msra.mxu0 0.0
        %2131 = vmatprep.subr.mxu0 0.0
        %2132 = vmatpush1.msra.mxu0 0.0
        %2133 = vmatprep.subr.mxu0 0.0
        %2134 = vmatpush1.msra.mxu0 0.0
        %2135 = vmatprep.subr.mxu0 0.0
        %2136 = vmatpush1.msra.mxu0 0.0
        %2137 = vmatprep.subr.mxu0 0.0
        %2138 = vmatpush1.msra.mxu0 0.0
        %2139 = vmatprep.subr.mxu0 0.0
        %2140 = vmatpush1.msra.mxu0 0.0
        %2141 = vmatprep.subr.mxu0 0.0
        %2142 = vmatpush1.msra.mxu0 0.0
        %2143 = vmatprep.subr.mxu0 0.0
        %2144 = vmatpush1.msra.mxu0 0.0
        %2145 = vmatprep.subr.mxu0 0.0
        %2146 = vmatpush1.msra.mxu0 0.0
        %2147 = vmatprep.mubr.f32.mxu0 0.0
        %2148 = vmatmul.mubr.f32.gmra.mrb[0].mxu0 %v2075
        %v2149 = vpop.f32.mrb[0].mxu0
        %v2150 = vadd.f32 0.0, %v2149
        %v2151 = vpop.f32.mrb[0].mxu0
        %2152 = vmatprep.mubr.f32.mxu0 0.0
        %2153 = vmatmul.mubr.f32.gmra.mrb[0].mxu0 %v2078
        %v2154 = vpop.f32.mrb[0].mxu0
        %v2155 = vadd.f32 0.0, %v2154
        %v2156 = vpop.f32.mrb[0].mxu0
        %2157 = vdwg.mxu0
        %v2159 = vsel %vm1650, %v1814, 0
        %v2162 = vsel %vm1650, %v1815, 0
        %v2165 = vsel %vm1654, %v1794, 0
        %2167 = vmatprep.subr.mxu0 0.0
        %2168 = vmatpush1.msra.mxu0 %v2165
        %2169 = vmatprep.subr.mxu0 0.0
        %2170 = vmatpush1.msra.mxu0 0.0
        %2171 = vmatprep.subr.mxu0 0.0
        %2172 = vmatpush1.msra.mxu0 0.0
        %2173 = vmatprep.subr.mxu0 0.0
        %2174 = vmatpush1.msra.mxu0 0.0
        %2175 = vmatprep.subr.mxu0 0.0
        %2176 = vmatpush1.msra.mxu0 0.0
        %2177 = vmatprep.subr.mxu0 0.0
        %2178 = vmatpush1.msra.mxu0 0.0
        %2179 = vmatprep.subr.mxu0 0.0
        %2180 = vmatpush1.msra.mxu0 0.0
        %2181 = vmatprep.subr.mxu0 0.0
        %2182 = vmatpush1.msra.mxu0 0.0
        %2183 = vmatprep.subr.mxu0 0.0
        %2184 = vmatpush1.msra.mxu0 0.0
        %2185 = vmatprep.subr.mxu0 0.0
        %2186 = vmatpush1.msra.mxu0 0.0
        %2187 = vmatprep.subr.mxu0 0.0
        %2188 = vmatpush1.msra.mxu0 0.0
        %2189 = vmatprep.subr.mxu0 0.0
        %2190 = vmatpush1.msra.mxu0 0.0
        %2191 = vmatprep.subr.mxu0 0.0
        %2192 = vmatpush1.msra.mxu0 0.0
        %2193 = vmatprep.subr.mxu0 0.0
        %2194 = vmatpush1.msra.mxu0 0.0
        %2195 = vmatprep.subr.mxu0 0.0
        %2196 = vmatpush1.msra.mxu0 0.0
        %2197 = vmatprep.subr.mxu0 0.0
        %2198 = vmatpush1.msra.mxu0 0.0
        %2199 = vmatprep.subr.mxu0 0.0
        %2200 = vmatpush1.msra.mxu0 0.0
        %2201 = vmatprep.subr.mxu0 0.0
        %2202 = vmatpush1.msra.mxu0 0.0
        %2203 = vmatprep.subr.mxu0 0.0
        %2204 = vmatpush1.msra.mxu0 0.0
        %2205 = vmatprep.subr.mxu0 0.0
        %2206 = vmatpush1.msra.mxu0 0.0
        %2207 = vmatprep.subr.mxu0 0.0
        %2208 = vmatpush1.msra.mxu0 0.0
        %2209 = vmatprep.subr.mxu0 0.0
        %2210 = vmatpush1.msra.mxu0 0.0
        %2211 = vmatprep.subr.mxu0 0.0
        %2212 = vmatpush1.msra.mxu0 0.0
        %2213 = vmatprep.subr.mxu0 0.0
        %2214 = vmatpush1.msra.mxu0 0.0
        %2215 = vmatprep.subr.mxu0 0.0
        %2216 = vmatpush1.msra.mxu0 0.0
        %2217 = vmatprep.subr.mxu0 0.0
        %2218 = vmatpush1.msra.mxu0 0.0
        %2219 = vmatprep.subr.mxu0 0.0
        %2220 = vmatpush1.msra.mxu0 0.0
        %2221 = vmatprep.subr.mxu0 0.0
        %2222 = vmatpush1.msra.mxu0 0.0
        %2223 = vmatprep.subr.mxu0 0.0
        %2224 = vmatpush1.msra.mxu0 0.0
        %2225 = vmatprep.subr.mxu0 0.0
        %2226 = vmatpush1.msra.mxu0 0.0
        %2227 = vmatprep.subr.mxu0 0.0
        %2228 = vmatpush1.msra.mxu0 0.0
        %2229 = vmatprep.subr.mxu0 0.0
        %2230 = vmatpush1.msra.mxu0 0.0
        %2231 = vmatprep.mubr.f32.mxu0 0.0
        %2232 = vmatmul.mubr.f32.gmra.mrb[0].mxu0 %v2159
        %v2233 = vpop.f32.mrb[0].mxu0
        %v2234 = vadd.f32 0.0, %v2233
        %v2235 = vpop.f32.mrb[0].mxu0
        %2236 = vmatprep.mubr.f32.mxu0 0.0
        %2237 = vmatmul.mubr.f32.gmra.mrb[0].mxu0 %v2162
        %v2238 = vpop.f32.mrb[0].mxu0
        %v2239 = vadd.f32 0.0, %v2238
        %v2240 = vpop.f32.mrb[0].mxu0
        %2241 = vdwg.mxu0
        %v2243 = vsel %vm1650, %v1816, 0
        %v2246 = vsel %vm1650, %v1817, 0
        %v2249 = vsel %vm1654, %v1804, 0
        %2251 = vmatprep.subr.mxu0 0.0
        %2252 = vmatpush1.msra.mxu0 %v2249
        %2253 = vmatprep.subr.mxu0 0.0
        %2254 = vmatpush1.msra.mxu0 0.0
        %2255 = vmatprep.subr.mxu0 0.0
        %2256 = vmatpush1.msra.mxu0 0.0
        %2257 = vmatprep.subr.mxu0 0.0
        %2258 = vmatpush1.msra.mxu0 0.0
        %2259 = vmatprep.subr.mxu0 0.0
        %2260 = vmatpush1.msra.mxu0 0.0
        %2261 = vmatprep.subr.mxu0 0.0
        %2262 = vmatpush1.msra.mxu0 0.0
        %2263 = vmatprep.subr.mxu0 0.0
        %2264 = vmatpush1.msra.mxu0 0.0
        %2265 = vmatprep.subr.mxu0 0.0
        %2266 = vmatpush1.msra.mxu0 0.0
        %2267 = vmatprep.subr.mxu0 0.0
        %2268 = vmatpush1.msra.mxu0 0.0
        %2269 = vmatprep.subr.mxu0 0.0
        %2270 = vmatpush1.msra.mxu0 0.0
        %2271 = vmatprep.subr.mxu0 0.0
        %2272 = vmatpush1.msra.mxu0 0.0
        %2273 = vmatprep.subr.mxu0 0.0
        %2274 = vmatpush1.msra.mxu0 0.0
        %2275 = vmatprep.subr.mxu0 0.0
        %2276 = vmatpush1.msra.mxu0 0.0
        %2277 = vmatprep.subr.mxu0 0.0
        %2278 = vmatpush1.msra.mxu0 0.0
        %2279 = vmatprep.subr.mxu0 0.0
        %2280 = vmatpush1.msra.mxu0 0.0
        %2281 = vmatprep.subr.mxu0 0.0
        %2282 = vmatpush1.msra.mxu0 0.0
        %2283 = vmatprep.subr.mxu0 0.0
        %2284 = vmatpush1.msra.mxu0 0.0
        %2285 = vmatprep.subr.mxu0 0.0
        %2286 = vmatpush1.msra.mxu0 0.0
        %2287 = vmatprep.subr.mxu0 0.0
        %2288 = vmatpush1.msra.mxu0 0.0
        %2289 = vmatprep.subr.mxu0 0.0
        %2290 = vmatpush1.msra.mxu0 0.0
        %2291 = vmatprep.subr.mxu0 0.0
        %2292 = vmatpush1.msra.mxu0 0.0
        %2293 = vmatprep.subr.mxu0 0.0
        %2294 = vmatpush1.msra.mxu0 0.0
        %2295 = vmatprep.subr.mxu0 0.0
        %2296 = vmatpush1.msra.mxu0 0.0
        %2297 = vmatprep.subr.mxu0 0.0
        %2298 = vmatpush1.msra.mxu0 0.0
        %2299 = vmatprep.subr.mxu0 0.0
        %2300 = vmatpush1.msra.mxu0 0.0
        %2301 = vmatprep.subr.mxu0 0.0
        %2302 = vmatpush1.msra.mxu0 0.0
        %2303 = vmatprep.subr.mxu0 0.0
        %2304 = vmatpush1.msra.mxu0 0.0
        %2305 = vmatprep.subr.mxu0 0.0
        %2306 = vmatpush1.msra.mxu0 0.0
        %2307 = vmatprep.subr.mxu0 0.0
        %2308 = vmatpush1.msra.mxu0 0.0
        %2309 = vmatprep.subr.mxu0 0.0
        %2310 = vmatpush1.msra.mxu0 0.0
        %2311 = vmatprep.subr.mxu0 0.0
        %2312 = vmatpush1.msra.mxu0 0.0
        %2313 = vmatprep.subr.mxu0 0.0
        %2314 = vmatpush1.msra.mxu0 0.0
        %2315 = vmatprep.mubr.f32.mxu0 0.0
        %2316 = vmatmul.mubr.f32.gmra.mrb[0].mxu0 %v2243
        %v2317 = vpop.f32.mrb[0].mxu0
        %v2318 = vadd.f32 0.0, %v2317
        %v2319 = vpop.f32.mrb[0].mxu0
        %2320 = vmatprep.mubr.f32.mxu0 0.0
        %2321 = vmatmul.mubr.f32.gmra.mrb[0].mxu0 %v2246
        %v2322 = vpop.f32.mrb[0].mxu0
        %v2323 = vadd.f32 0.0, %v2322
        %v2324 = vpop.f32.mrb[0].mxu0
        %2325 = vdwg.mxu0
        %v2327 = vsel %vm1650, %v1818, 0
        %v2330 = vsel %vm1650, %v1819, 0
        %v2333 = vsel %vm1654, %v1801, 0
        %2335 = vmatprep.subr.mxu0 0.0
        %2336 = vmatpush1.msra.mxu0 %v2333
        %2337 = vmatprep.subr.mxu0 0.0
        %2338 = vmatpush1.msra.mxu0 0.0
        %2339 = vmatprep.subr.mxu0 0.0
        %2340 = vmatpush1.msra.mxu0 0.0
        %2341 = vmatprep.subr.mxu0 0.0
        %2342 = vmatpush1.msra.mxu0 0.0
        %2343 = vmatprep.subr.mxu0 0.0
        %2344 = vmatpush1.msra.mxu0 0.0
        %2345 = vmatprep.subr.mxu0 0.0
        %2346 = vmatpush1.msra.mxu0 0.0
        %2347 = vmatprep.subr.mxu0 0.0
        %2348 = vmatpush1.msra.mxu0 0.0
        %2349 = vmatprep.subr.mxu0 0.0
        %2350 = vmatpush1.msra.mxu0 0.0
        %2351 = vmatprep.subr.mxu0 0.0
        %2352 = vmatpush1.msra.mxu0 0.0
        %2353 = vmatprep.subr.mxu0 0.0
        %2354 = vmatpush1.msra.mxu0 0.0
        %2355 = vmatprep.subr.mxu0 0.0
        %2356 = vmatpush1.msra.mxu0 0.0
        %2357 = vmatprep.subr.mxu0 0.0
        %2358 = vmatpush1.msra.mxu0 0.0
        %2359 = vmatprep.subr.mxu0 0.0
        %2360 = vmatpush1.msra.mxu0 0.0
        %2361 = vmatprep.subr.mxu0 0.0
        %2362 = vmatpush1.msra.mxu0 0.0
        %2363 = vmatprep.subr.mxu0 0.0
        %2364 = vmatpush1.msra.mxu0 0.0
        %2365 = vmatprep.subr.mxu0 0.0
        %2366 = vmatpush1.msra.mxu0 0.0
        %2367 = vmatprep.subr.mxu0 0.0
        %2368 = vmatpush1.msra.mxu0 0.0
        %2369 = vmatprep.subr.mxu0 0.0
        %2370 = vmatpush1.msra.mxu0 0.0
        %2371 = vmatprep.subr.mxu0 0.0
        %2372 = vmatpush1.msra.mxu0 0.0
        %2373 = vmatprep.subr.mxu0 0.0
        %2374 = vmatpush1.msra.mxu0 0.0
        %2375 = vmatprep.subr.mxu0 0.0
        %2376 = vmatpush1.msra.mxu0 0.0
        %2377 = vmatprep.subr.mxu0 0.0
        %2378 = vmatpush1.msra.mxu0 0.0
        %2379 = vmatprep.subr.mxu0 0.0
        %2380 = vmatpush1.msra.mxu0 0.0
        %2381 = vmatprep.subr.mxu0 0.0
        %2382 = vmatpush1.msra.mxu0 0.0
        %2383 = vmatprep.subr.mxu0 0.0
        %2384 = vmatpush1.msra.mxu0 0.0
        %2385 = vmatprep.subr.mxu0 0.0
        %2386 = vmatpush1.msra.mxu0 0.0
        %2387 = vmatprep.subr.mxu0 0.0
        %2388 = vmatpush1.msra.mxu0 0.0
        %2389 = vmatprep.subr.mxu0 0.0
        %2390 = vmatpush1.msra.mxu0 0.0
        %2391 = vmatprep.subr.mxu0 0.0
        %2392 = vmatpush1.msra.mxu0 0.0
        %2393 = vmatprep.subr.mxu0 0.0
        %2394 = vmatpush1.msra.mxu0 0.0
        %2395 = vmatprep.subr.mxu0 0.0
        %2396 = vmatpush1.msra.mxu0 0.0
        %2397 = vmatprep.subr.mxu0 0.0
        %2398 = vmatpush1.msra.mxu0 0.0
        %2399 = vmatprep.mubr.f32.mxu0 0.0
        %2400 = vmatmul.mubr.f32.gmra.mrb[0].mxu0 %v2327
        %v2401 = vpop.f32.mrb[0].mxu0
        %v2402 = vadd.f32 0.0, %v2401
        %v2403 = vpop.f32.mrb[0].mxu0
        %2404 = vmatprep.mubr.f32.mxu0 0.0
        %2405 = vmatmul.mubr.f32.gmra.mrb[0].mxu0 %v2330
        %v2406 = vpop.f32.mrb[0].mxu0
        %v2407 = vadd.f32 0.0, %v2406
        %v2408 = vpop.f32.mrb[0].mxu0
        %2409 = vdwg.mxu0
        %v2411 = vsel %vm1650, %v1820, 0
        %v2414 = vsel %vm1650, %v1821, 0
        %v2417 = vsel %vm1654, %v1805, 0
        %2419 = vmatprep.subr.mxu0 0.0
        %2420 = vmatpush1.msra.mxu0 %v2417
        %2421 = vmatprep.subr.mxu0 0.0
        %2422 = vmatpush1.msra.mxu0 0.0
        %2423 = vmatprep.subr.mxu0 0.0
        %2424 = vmatpush1.msra.mxu0 0.0
        %2425 = vmatprep.subr.mxu0 0.0
        %2426 = vmatpush1.msra.mxu0 0.0
        %2427 = vmatprep.subr.mxu0 0.0
        %2428 = vmatpush1.msra.mxu0 0.0
        %2429 = vmatprep.subr.mxu0 0.0
        %2430 = vmatpush1.msra.mxu0 0.0
        %2431 = vmatprep.subr.mxu0 0.0
        %2432 = vmatpush1.msra.mxu0 0.0
        %2433 = vmatprep.subr.mxu0 0.0
        %2434 = vmatpush1.msra.mxu0 0.0
        %2435 = vmatprep.subr.mxu0 0.0
        %2436 = vmatpush1.msra.mxu0 0.0
        %2437 = vmatprep.subr.mxu0 0.0
        %2438 = vmatpush1.msra.mxu0 0.0
        %2439 = vmatprep.subr.mxu0 0.0
        %2440 = vmatpush1.msra.mxu0 0.0
        %2441 = vmatprep.subr.mxu0 0.0
        %2442 = vmatpush1.msra.mxu0 0.0
        %2443 = vmatprep.subr.mxu0 0.0
        %2444 = vmatpush1.msra.mxu0 0.0
        %2445 = vmatprep.subr.mxu0 0.0
        %2446 = vmatpush1.msra.mxu0 0.0
        %2447 = vmatprep.subr.mxu0 0.0
        %2448 = vmatpush1.msra.mxu0 0.0
        %2449 = vmatprep.subr.mxu0 0.0
        %2450 = vmatpush1.msra.mxu0 0.0
        %2451 = vmatprep.subr.mxu0 0.0
        %2452 = vmatpush1.msra.mxu0 0.0
        %2453 = vmatprep.subr.mxu0 0.0
        %2454 = vmatpush1.msra.mxu0 0.0
        %2455 = vmatprep.subr.mxu0 0.0
        %2456 = vmatpush1.msra.mxu0 0.0
        %2457 = vmatprep.subr.mxu0 0.0
        %2458 = vmatpush1.msra.mxu0 0.0
        %2459 = vmatprep.subr.mxu0 0.0
        %2460 = vmatpush1.msra.mxu0 0.0
        %2461 = vmatprep.subr.mxu0 0.0
        %2462 = vmatpush1.msra.mxu0 0.0
        %2463 = vmatprep.subr.mxu0 0.0
        %2464 = vmatpush1.msra.mxu0 0.0
        %2465 = vmatprep.subr.mxu0 0.0
        %2466 = vmatpush1.msra.mxu0 0.0
        %2467 = vmatprep.subr.mxu0 0.0
        %2468 = vmatpush1.msra.mxu0 0.0
        %2469 = vmatprep.subr.mxu0 0.0
        %2470 = vmatpush1.msra.mxu0 0.0
        %2471 = vmatprep.subr.mxu0 0.0
        %2472 = vmatpush1.msra.mxu0 0.0
        %2473 = vmatprep.subr.mxu0 0.0
        %2474 = vmatpush1.msra.mxu0 0.0
        %2475 = vmatprep.subr.mxu0 0.0
        %2476 = vmatpush1.msra.mxu0 0.0
        %2477 = vmatprep.subr.mxu0 0.0
        %2478 = vmatpush1.msra.mxu0 0.0
        %2479 = vmatprep.subr.mxu0 0.0
        %2480 = vmatpush1.msra.mxu0 0.0
        %2481 = vmatprep.subr.mxu0 0.0
        %2482 = vmatpush1.msra.mxu0 0.0
        %2483 = vmatprep.mubr.f32.mxu0 0.0
        %2484 = vmatmul.mubr.f32.gmra.mrb[0].mxu0 %v2411
        %v2485 = vpop.f32.mrb[0].mxu0
        %v2486 = vadd.f32 0.0, %v2485
        %v2487 = vpop.f32.mrb[0].mxu0
        %2488 = vmatprep.mubr.f32.mxu0 0.0
        %2489 = vmatmul.mubr.f32.gmra.mrb[0].mxu0 %v2414
        %v2490 = vpop.f32.mrb[0].mxu0
        %v2491 = vadd.f32 0.0, %v2490
        %v2492 = vpop.f32.mrb[0].mxu0
        %2493 = vdwg.mxu0
        %v2494 = vadd.f32 %v1630, %v1898
        %v2495 = vadd.f32 %v1631, %v1903
        %v2496 = vadd.f32 %v1632, %v1982
        %v2497 = vadd.f32 %v1633, %v1987
        %v2498 = vadd.f32 %v1634, %v2066
        %v2499 = vadd.f32 %v1635, %v2071
        %v2500 = vadd.f32 %v1636, %v2150
        %v2501 = vadd.f32 %v1637, %v2155
        %v2502 = vadd.f32 %v1638, %v2234
        %v2503 = vadd.f32 %v1639, %v2239
        %v2504 = vadd.f32 %v1640, %v2318
        %v2505 = vadd.f32 %v1641, %v2323
        %v2506 = vadd.f32 %v1642, %v2402
        %v2507 = vadd.f32 %v1643, %v2407
        %v2508 = vadd.f32 %v1644, %v2486
        %v2509 = vadd.f32 %v1645, %v2491
        %v2510 = vld [vmem:[%s10] sm:$0xff]
        %v2511 = vld [vmem:[%s10 + $0x8] sm:$0xff]
        %v2512 = vld [vmem:[%s10 + $0x10] sm:$0xff]
        %v2513 = vld [vmem:[%s10 + $0x18] sm:$0xff]
        %v2514 = vld [vmem:[%s11] sm:$0xff]
        %v2515 = vld [vmem:[%s11 + $0x8] sm:$0xff]
        %v2516 = vld [vmem:[%s11 + $0x10] sm:$0xff]
        %v2517 = vld [vmem:[%s11 + $0x18] sm:$0xff]
        %2519 = vset.pattern.permute.xlu0 0
        %2520 = vperm.xlu0 %2519, %v2514
        %v2521 = vpop.permute.xlu0 %2520
        %2524 = vset.pattern.permute.xlu0 0
        %2525 = vperm.xlu0 %2524, %v2515
        %v2526 = vpop.permute.xlu0 %2525
        %2529 = vset.pattern.permute.xlu0 0
        %2530 = vperm.xlu0 %2529, %v2516
        %v2531 = vpop.permute.xlu0 %2530
        %2534 = vset.pattern.permute.xlu0 0
        %2535 = vperm.xlu0 %2534, %v2517
        %v2536 = vpop.permute.xlu0 %2535
        %vm2538 = vcmask 261120
        %v2540 = vsel %vm2538, %v2510, 0
        %v2543 = vsel %vm2538, %v2511, 0
        %v2546 = vsel %vm2538, %v2512, 0
        %v2549 = vsel %vm2538, %v2513, 0
        %v2552 = vsel %vm2538, %v2494, 0
        %v2555 = vsel %vm2538, %v2495, 0
        %v2558 = vsel %vm2538, %v2496, 0
        %v2561 = vsel %vm2538, %v2497, 0
        %v2564 = vsel %vm2538, %v2498, 0
        %v2567 = vsel %vm2538, %v2499, 0
        %v2570 = vsel %vm2538, %v2500, 0
        %v2573 = vsel %vm2538, %v2501, 0
        %v2576 = vsel %vm2538, %v2502, 0
        %v2579 = vsel %vm2538, %v2503, 0
        %v2582 = vsel %vm2538, %v2504, 0
        %v2585 = vsel %vm2538, %v2505, 0
        %v2588 = vsel %vm2538, %v2506, 0
        %v2591 = vsel %vm2538, %v2507, 0
        %v2594 = vsel %vm2538, %v2508, 0
        %v2597 = vsel %vm2538, %v2509, 0
        %2599 = vmatprep.subr.mxu0 0.0
        %2600 = vmatpush1.xpose.msra.mxu0 %v2552
        %2601 = vmatprep.subr.mxu0 0.0
        %2602 = vmatpush1.xpose.msra.mxu0 %v2555
        %2603 = vmatprep.subr.mxu0 0.0
        %2604 = vmatpush1.xpose.msra.mxu0 %v2558
        %2605 = vmatprep.subr.mxu0 0.0
        %2606 = vmatpush1.xpose.msra.mxu0 %v2561
        %2607 = vmatprep.subr.mxu0 0.0
        %2608 = vmatpush1.xpose.msra.mxu0 %v2564
        %2609 = vmatprep.subr.mxu0 0.0
        %2610 = vmatpush1.xpose.msra.mxu0 %v2567
        %2611 = vmatprep.subr.mxu0 0.0
        %2612 = vmatpush1.xpose.msra.mxu0 %v2570
        %2613 = vmatprep.subr.mxu0 0.0
        %2614 = vmatpush1.xpose.msra.mxu0 %v2573
        %2615 = vmatprep.subr.mxu0 0.0
        %2616 = vmatpush1.xpose.msra.mxu0 %v2576
        %2617 = vmatprep.subr.mxu0 0.0
        %2618 = vmatpush1.xpose.msra.mxu0 %v2579
        %2619 = vmatprep.subr.mxu0 0.0
        %2620 = vmatpush1.xpose.msra.mxu0 %v2582
        %2621 = vmatprep.subr.mxu0 0.0
        %2622 = vmatpush1.xpose.msra.mxu0 %v2585
        %2623 = vmatprep.subr.mxu0 0.0
        %2624 = vmatpush1.xpose.msra.mxu0 %v2588
        %2625 = vmatprep.subr.mxu0 0.0
        %2626 = vmatpush1.xpose.msra.mxu0 %v2591
        %2627 = vmatprep.subr.mxu0 0.0
        %2628 = vmatpush1.xpose.msra.mxu0 %v2594
        %2629 = vmatprep.subr.mxu0 0.0
        %2630 = vmatpush1.xpose.msra.mxu0 %v2597
        %2631 = vmatprep.subr.mxu0 0.0
        %2632 = vmatpush1.xpose.msra.mxu0 0.0
        %2633 = vmatprep.subr.mxu0 0.0
        %2634 = vmatpush1.xpose.msra.mxu0 0.0
        %2635 = vmatprep.subr.mxu0 0.0
        %2636 = vmatpush1.xpose.msra.mxu0 0.0
        %2637 = vmatprep.subr.mxu0 0.0
        %2638 = vmatpush1.xpose.msra.mxu0 0.0
        %2639 = vmatprep.subr.mxu0 0.0
        %2640 = vmatpush1.xpose.msra.mxu0 0.0
        %2641 = vmatprep.subr.mxu0 0.0
        %2642 = vmatpush1.xpose.msra.mxu0 0.0
        %2643 = vmatprep.subr.mxu0 0.0
        %2644 = vmatpush1.xpose.msra.mxu0 0.0
        %2645 = vmatprep.subr.mxu0 0.0
        %2646 = vmatpush1.xpose.msra.mxu0 0.0
        %2647 = vmatprep.subr.mxu0 0.0
        %2648 = vmatpush1.xpose.msra.mxu0 0.0
        %2649 = vmatprep.subr.mxu0 0.0
        %2650 = vmatpush1.xpose.msra.mxu0 0.0
        %2651 = vmatprep.subr.mxu0 0.0
        %2652 = vmatpush1.xpose.msra.mxu0 0.0
        %2653 = vmatprep.subr.mxu0 0.0
        %2654 = vmatpush1.xpose.msra.mxu0 0.0
        %2655 = vmatprep.subr.mxu0 0.0
        %2656 = vmatpush1.xpose.msra.mxu0 0.0
        %2657 = vmatprep.subr.mxu0 0.0
        %2658 = vmatpush1.xpose.msra.mxu0 0.0
        %2659 = vmatprep.subr.mxu0 0.0
        %2660 = vmatpush1.xpose.msra.mxu0 0.0
        %2661 = vmatprep.subr.mxu0 0.0
        %2662 = vmatpush1.xpose.msra.mxu0 0.0
        %2663 = vmatprep.mubr.f32.mxu0 0.0
        %2664 = vmatmul.mubr.f32.gmra.mrb[0].mxu0 %v2540
        %v2665 = vpop.f32.mrb[0].mxu0
        %v2666 = vadd.f32 %v2521, %v2665
        %v2667 = vpop.f32.mrb[0].mxu0
        %2668 = vmatprep.mubr.f32.mxu0 0.0
        %2669 = vmatmul.mubr.f32.gmra.mrb[0].mxu0 %v2543
        %v2670 = vpop.f32.mrb[0].mxu0
        %v2671 = vadd.f32 %v2526, %v2670
        %v2672 = vpop.f32.mrb[0].mxu0
        %2673 = vmatprep.mubr.f32.mxu0 0.0
        %2674 = vmatmul.mubr.f32.gmra.mrb[0].mxu0 %v2546
        %v2675 = vpop.f32.mrb[0].mxu0
        %v2676 = vadd.f32 %v2531, %v2675
        %v2677 = vpop.f32.mrb[0].mxu0
        %2678 = vmatprep.mubr.f32.mxu0 0.0
        %2679 = vmatmul.mubr.f32.gmra.mrb[0].mxu0 %v2549
        %v2680 = vpop.f32.mrb[0].mxu0
        %v2681 = vadd.f32 %v2536, %v2680
        %v2682 = vpop.f32.mrb[0].mxu0
        %2683 = vdwg.mxu0
        %v2684 = vmax.f32 %v2666, 0.0
        %v2685 = vmax.f32 %v2671, 0.0
        %v2686 = vmax.f32 %v2676, 0.0
        %v2687 = vmax.f32 %v2681, 0.0
        %v2688 = vld [vmem:[%s12] sm:$0xff]
        %v2689 = vld [vmem:[%s12 + $0x8] sm:$0xff]
        %v2690 = vld [vmem:[%s13] sm:$0xff]
        %v2691 = vld [vmem:[%s13 + $0x8] sm:$0xff]
        %2693 = vset.pattern.permute.xlu0 0
        %2694 = vperm.xlu0 %2693, %v2690
        %v2695 = vpop.permute.xlu0 %2694
        %2698 = vset.pattern.permute.xlu0 0
        %2699 = vperm.xlu0 %2698, %v2691
        %v2700 = vpop.permute.xlu0 %2699
        %v2703 = vsel %vm2538, %v2688, 0
        %v2706 = vsel %vm2538, %v2689, 0
        %2708 = vmatprep.subr.mxu0 0.0
        %2709 = vmatpush1.msra.mxu0 %v2684
        %2710 = vmatprep.subr.mxu0 0.0
        %2711 = vmatpush1.msra.mxu0 %v2685
        %2712 = vmatprep.subr.mxu0 0.0
        %2713 = vmatpush1.msra.mxu0 %v2686
        %2714 = vmatprep.subr.mxu0 0.0
        %2715 = vmatpush1.msra.mxu0 %v2687
        %2716 = vmatprep.subr.mxu0 0.0
        %2717 = vmatpush1.msra.mxu0 0.0
        %2718 = vmatprep.subr.mxu0 0.0
        %2719 = vmatpush1.msra.mxu0 0.0
        %2720 = vmatprep.subr.mxu0 0.0
        %2721 = vmatpush1.msra.mxu0 0.0
        %2722 = vmatprep.subr.mxu0 0.0
        %2723 = vmatpush1.msra.mxu0 0.0
        %2724 = vmatprep.subr.mxu0 0.0
        %2725 = vmatpush1.msra.mxu0 0.0
        %2726 = vmatprep.subr.mxu0 0.0
        %2727 = vmatpush1.msra.mxu0 0.0
        %2728 = vmatprep.subr.mxu0 0.0
        %2729 = vmatpush1.msra.mxu0 0.0
        %2730 = vmatprep.subr.mxu0 0.0
        %2731 = vmatpush1.msra.mxu0 0.0
        %2732 = vmatprep.subr.mxu0 0.0
        %2733 = vmatpush1.msra.mxu0 0.0
        %2734 = vmatprep.subr.mxu0 0.0
        %2735 = vmatpush1.msra.mxu0 0.0
        %2736 = vmatprep.subr.mxu0 0.0
        %2737 = vmatpush1.msra.mxu0 0.0
        %2738 = vmatprep.subr.mxu0 0.0
        %2739 = vmatpush1.msra.mxu0 0.0
        %2740 = vmatprep.subr.mxu0 0.0
        %2741 = vmatpush1.msra.mxu0 0.0
        %2742 = vmatprep.subr.mxu0 0.0
        %2743 = vmatpush1.msra.mxu0 0.0
        %2744 = vmatprep.subr.mxu0 0.0
        %2745 = vmatpush1.msra.mxu0 0.0
        %2746 = vmatprep.subr.mxu0 0.0
        %2747 = vmatpush1.msra.mxu0 0.0
        %2748 = vmatprep.subr.mxu0 0.0
        %2749 = vmatpush1.msra.mxu0 0.0
        %2750 = vmatprep.subr.mxu0 0.0
        %2751 = vmatpush1.msra.mxu0 0.0
        %2752 = vmatprep.subr.mxu0 0.0
        %2753 = vmatpush1.msra.mxu0 0.0
        %2754 = vmatprep.subr.mxu0 0.0
        %2755 = vmatpush1.msra.mxu0 0.0
        %2756 = vmatprep.subr.mxu0 0.0
        %2757 = vmatpush1.msra.mxu0 0.0
        %2758 = vmatprep.subr.mxu0 0.0
        %2759 = vmatpush1.msra.mxu0 0.0
        %2760 = vmatprep.subr.mxu0 0.0
        %2761 = vmatpush1.msra.mxu0 0.0
        %2762 = vmatprep.subr.mxu0 0.0
        %2763 = vmatpush1.msra.mxu0 0.0
        %2764 = vmatprep.subr.mxu0 0.0
        %2765 = vmatpush1.msra.mxu0 0.0
        %2766 = vmatprep.subr.mxu0 0.0
        %2767 = vmatpush1.msra.mxu0 0.0
        %2768 = vmatprep.subr.mxu0 0.0
        %2769 = vmatpush1.msra.mxu0 0.0
        %2770 = vmatprep.subr.mxu0 0.0
        %2771 = vmatpush1.msra.mxu0 0.0
        %2772 = vmatprep.mubr.f32.mxu0 0.0
        %2773 = vmatmul.mubr.f32.gmra.mrb[0].mxu0 %v2703
        %v2774 = vpop.f32.mrb[0].mxu0
        %v2775 = vadd.f32 %v2695, %v2774
        %v2776 = vpop.f32.mrb[0].mxu0
        %2777 = vmatprep.mubr.f32.mxu0 0.0
        %2778 = vmatmul.mubr.f32.gmra.mrb[0].mxu0 %v2706
        %v2779 = vpop.f32.mrb[0].mxu0
        %v2780 = vadd.f32 %v2700, %v2779
        %v2781 = vpop.f32.mrb[0].mxu0
        %2782 = vdwg.mxu0
        %v2783 = vmul.f32 %v2775, %v2775
        %v2784 = vmul.f32 %v2780, %v2780
        %v2785 = vadd.f32 %v2783, %v2784
        %v2786 = vrot.slane %v2785, 4
        %v2787 = vadd.f32 %v2785, %v2786
        %v2788 = vrot.slane %v2787, 2
        %v2789 = vadd.f32 %v2787, %v2788
        %v2790 = vrot.slane %v2789, 1
        %v2791 = vadd.f32 %v2789, %v2790
        %v2792 = vmax.f32 %v2791, 1e-24
        %v2793 = vrsqrt.pop %v2792
        %v2794 = vmul.f32 %v2775, %v2793
        %v2795 = vmul.f32 %v2780, %v2793
        %2796 = vst [vmem:[%s617] sm:$0xff] %v2794
        %2797 = vst [vmem:[%s617 + $0x8] sm:$0xff] %v2795
        %s2798 = sand.u32 %s388, 1
        %s2799 = scalar_lea.sflag [#allocation3], %s2798
        %s2800 = sand.u32 %s388, 1
        %s2801 = smul.addr %s2800, 16
        %s2802 = scalar_lea.vmem [#allocation2], %s2801
        // Predicated region
        $region77: #{tpu_custom_call.1} parent=75 // pred_check
          %p2803 = pneg %p398
        $region78: #{tpu_custom_call.1} parent=75 // pred_check_branch
          %2805 = sbr.rel (%p2803) target = $region80
        $region79: #{tpu_custom_call.1} parent=75 // pred_region
          %s2807 = ssub.s32 256, 256
          %2808 = vsyncadd %s2799, %s2807
          %s2809 = smul.addr %s32, 4
          %s2810 = sadd.s32 %s33, %s2809
          %s2811 = smul.addr %s2810, 128
          %s2812 = scalar_lea.hbm %s14, %s2811
          %s2813 = sshll.u32 %s2802, 4
          %s2814 = int_to_ptr.vmem [resolvable:$true] %s2813
          %2819 = dma.vmem_to_hbm [thread:$0]  %s2814, 256, %s2812, %s2799, 128, 256, 8
        $region80: #{tpu_custom_call.1} parent=75 // pred_fallthru
          _
      $region76: #{tpu_custom_call.1} parent=5 // pred_fallthru
        _
      %p2820 = scmp.le.s32.totalorder 2, %s23
      // Predicated region
      $region81: #{tpu_custom_call.1} parent=5 // pred_check
        %p2821 = pneg %p2820
      $region82: #{tpu_custom_call.1} parent=5 // pred_check_branch
        %2823 = sbr.rel (%p2821) target = $region84
      $region83: #{tpu_custom_call.1} parent=5 // pred_region
        %s2824 = ssub.s32 %s23, 2
        // Predicated region
        $region85: #{tpu_custom_call.1} parent=83 // pred_check
          %p2825 = pneg %p404
        $region86: #{tpu_custom_call.1} parent=83 // pred_check_branch
          %2827 = sbr.rel (%p2825) target = $region88
        $region87: #{tpu_custom_call.1} parent=83 // pred_region
          %s2828 = sand.u32 %s389, 1
          %s2829 = scalar_lea.sflag [#allocation3], %s2828
          %s2830 = sand.u32 %s389, 1
          %s2831 = smul.addr %s2830, 16
          %s2832 = scalar_lea.vmem [#allocation2], %s2831
          %2833 = dma.done %s2829, 256
        $region88: #{tpu_custom_call.1} parent=83 // pred_fallthru
          _
      $region84: #{tpu_custom_call.1} parent=5 // pred_fallthru
        _
    $region6: #{tpu_custom_call.1} parent=1 // loop_footer
      %s27 = sadd.s32 1, %s23
    $region7: #{tpu_custom_call.1} parent=1 // loop_footer_branch
      %22 = sbr.rel target = $region3
    $region8: #{tpu_custom_call.1} parent=1 // loop_exit
      _
    %2834 = vsyncpa [#allocation3], 1
    %s2835 = scalar_lea.sflag [#allocation3], 1
    %2836 = vsyncpa %s2835, 1

</llo_original>
